<compile_context>
chip_gen: v6e
topology: v6e:2x2x1
jax: 0.10.0
libtpu: 0.0.40
codegen_flags: <defaults>
</compile_context>

<pallas_src>
import functools

import jax
import jax.numpy as jnp
from jax import lax
from jax.experimental import pallas as pl
from jax.experimental.pallas import tpu as pltpu


# ------------------------------ Pallas kernel -------------------------------

def _sep_conv_kernel(xp_ref, dwk_ref, wt_ref, b_ref, o_ref, *, H, Wp):
    """Fused depthwise-3x3 + pointwise-1x1(+folded BN) for one image.

    xp_ref : (H+2, Wp+2, C)  bf16  zero-padded NHWC image (batch dim squeezed)
    dwk_ref: (9, C)          f32   depthwise taps, row t = dh*3 + dw, channels on lanes
    wt_ref : (Coutp, C)      bf16  pointwise weight with BN scale folded (row = out channel)
    b_ref  : (Coutp, 1)      f32   pointwise bias with BN shift folded
    o_ref  : (Coutp, H*Wp)   bf16  channel-major (NCHW) flattened output, lane-dense
    """
    C = xp_ref.shape[-1]

    # Load all 9 depthwise taps once (single small block, no per-tap row loads).
    dwk = dwk_ref[...]                                         # (9, C) f32

    # Depthwise 3x3: the three dw-shifted windows are computed ONCE (only dw=1,2 need a
    # sublane relayout) and reused across the 3 dh rows, which are free leading-dim views.
    # f32 upcast + f32 accumulation on the VPU (required on v5e, correct everywhere).
    acc = jnp.zeros((H, Wp, C), jnp.float32)
    for dw in range(3):
        sh = xp_ref[:, dw:dw + Wp, :].astype(jnp.float32)      # (H+2, Wp, C)
        for dh in range(3):
            acc = acc + sh[dh:dh + H] * dwk[3 * dh + dw]

    # Pointwise 1x1 (+ folded BN) on the MXU, emitted channel-major so the result is
    # already NCHW:   y[o, p] = sum_c wt[o, c] * acc[p, c]      (M = H*Wp = 256 rows)
    a = acc.reshape(H * Wp, C).astype(jnp.bfloat16)            # (M, C)
    y = lax.dot_general(wt_ref[...], a,
                        dimension_numbers=(((1,), (1,)), ((), ())),
                        preferred_element_type=jnp.float32)    # (Coutp, M) f32 acc
    o_ref[...] = (y + b_ref[...]).astype(o_ref.dtype)          # bf16 writeback


# ------------------------------ host wrapper --------------------------------

def _round_up(x, m):
    return ((x + m - 1) // m) * m


def _fold_params(params, *, norm=True, eps=1e-3):
    """Fold BN (inference, running stats) into the pointwise conv weight/bias."""
    cin = params["dw"].shape[0]
    dwk = params["dw"].reshape(cin, 9).T                       # (9, Cin)
    wt = params["pw"][:, :, 0, 0]                              # (Cout, Cin) -- row = out channel
    b = params["pb"]                                           # (Cout,)
    if norm:
        scale = params["gamma"] / jnp.sqrt(params["var"] + eps)
        shift = params["beta"] - params["mean"] * scale
        wt = wt * scale[:, None]
        b = b * scale + shift
    return dwk.astype(jnp.float32), wt.astype(jnp.float32), b.astype(jnp.float32)


def separable_conv_block_pallas(x_nchw, params, *, norm=True):
    N, C, H, W = x_nchw.shape
    cout = params["pw"].shape[0]
    Wp = _round_up(W, 8)              # keeps the in-kernel (H, Wp, C) -> (H*Wp, C) flatten clean
    coutp = _round_up(cout, 8)        # sublane-aligned output-channel dim

    dwk, wt, b = _fold_params(params, norm=norm)
    wt = jnp.pad(wt, ((0, coutp - cout), (0, 0))).astype(jnp.bfloat16)
    b = jnp.pad(b, (0, coutp - cout)).reshape(coutp, 1).astype(jnp.float32)

    # Single host-side layout pass: bf16 cast FIRST (halves transpose bytes), then
    # NCHW -> NHWC transpose + conv halo / width-alignment pad in one fused expression.
    x_pad = jnp.pad(
        jnp.transpose(x_nchw.astype(jnp.bfloat16), (0, 2, 3, 1)),
        ((0, 0), (1, 1), (1, 1 + Wp - W), (0, 0)))             # (N, H+2, Wp+2, C) bf16
    Hp2, Wp2 = H + 2, Wp + 2

    kernel = functools.partial(_sep_conv_kernel, H=H, Wp=Wp)
    out_flat = pl.pallas_call(
        kernel,
        out_shape=jax.ShapeDtypeStruct((N, coutp, H * Wp), jnp.bfloat16),
        grid_spec=pltpu.PrefetchScalarGridSpec(
            num_scalar_prefetch=0,
            grid=(N,),
            in_specs=[
                pl.BlockSpec((None, Hp2, Wp2, C), lambda n: (n, 0, 0, 0)),
                pl.BlockSpec((9, C), lambda n: (0, 0)),
                pl.BlockSpec((coutp, C), lambda n: (0, 0)),
                pl.BlockSpec((coutp, 1), lambda n: (0, 0)),
            ],
            out_specs=pl.BlockSpec((None, coutp, H * Wp), lambda n: (n, 0, 0)),
        ),
        compiler_params=pltpu.CompilerParams(
            dimension_semantics=("parallel",),
            vmem_limit_bytes=16 * 1024 * 1024),
    )(x_pad, dwk, wt, b)

    # Channel-major output is already NCHW; split the pixel axis, drop padding if any.
    out = out_flat.reshape(N, coutp, H, Wp)
    if coutp != cout or Wp != W:
        out = out[:, :cout, :, :W]
    return out                                                 # bf16 NCHW


# --------------------------- pure-JAX references ----------------------------

def separable_conv_block_ref_f32(x_nchw, params, *, norm=True, eps=1e-3):
    """Exact f32 reference: lax depthwise conv -> 1x1 conv + bias -> eval-mode BN."""
    C = x_nchw.shape[1]
    y = lax.conv_general_dilated(
        x_nchw, params["dw"], window_strides=(1, 1), padding=((1, 1), (1, 1)),
        dimension_numbers=("NCHW", "OIHW", "NCHW"), feature_group_count=C)
    w = params["pw"][:, :, 0, 0]                               # (Cout, Cin)
    y = jnp.einsum("nchw,dc->ndhw", y, w) + params["pb"][None, :, None, None]
    if norm:
        scale = params["gamma"] / jnp.sqrt(params["var"] + eps)
        shift = params["beta"] - params["mean"] * scale
        y = y * scale[None, :, None, None] + shift[None, :, None, None]
    return y


def separable_conv_block_ref_matched(x_nchw, params, *, norm=True, eps=1e-3):
    """Reference with the SAME bf16 casts / accumulation order as the kernel."""
    N, C, H, W = x_nchw.shape
    dwk, wt, b = _fold_params(params, norm=norm, eps=eps)
    xp = jnp.pad(jnp.transpose(x_nchw.astype(jnp.bfloat16), (0, 2, 3, 1)),
                 ((0, 0), (1, 1), (1, 1), (0, 0)))
    acc = jnp.zeros((N, H, W, C), jnp.float32)
    for dw in range(3):
        sh = xp[:, :, dw:dw + W, :].astype(jnp.float32)
        for dh in range(3):
            acc = acc + sh[:, dh:dh + H] * dwk[3 * dh + dw]
    y = jnp.einsum("od,nhwd->nohw", wt.astype(jnp.bfloat16), acc.astype(jnp.bfloat16),
                   preferred_element_type=jnp.float32) + b[None, :, None, None]
    return y.astype(jnp.bfloat16)


# ------------------------------ param init ----------------------------------

def init_params(key, cin, cout):
    ks = jax.random.split(key, 7)
    return dict(
        dw=0.3 * jax.random.normal(ks[0], (cin, 1, 3, 3), jnp.float32),   # depthwise (groups=cin)
        pw=0.1 * jax.random.normal(ks[1], (cout, cin, 1, 1), jnp.float32),
        pb=0.1 * jax.random.normal(ks[2], (cout,), jnp.float32),
        gamma=1.0 + 0.1 * jax.random.normal(ks[3], (cout,), jnp.float32),
        beta=0.1 * jax.random.normal(ks[4], (cout,), jnp.float32),
        mean=0.1 * jax.random.normal(ks[5], (cout,), jnp.float32),
        var=jax.random.uniform(ks[6], (cout,), jnp.float32, minval=0.5, maxval=1.5),
    )


# ----------------------------------- main ------------------------------------

if __name__ == "__main__":
    N, CIN, COUT, H, W = 2, 64, 88, 16, 16   # COUT=88 exercises the non-128 out-channel path

    key = jax.random.PRNGKey(0)
    kx, kp = jax.random.split(key)
    x = jax.random.normal(kx, (N, CIN, H, W), jnp.float32)     # NCHW like PyTorch
    params = init_params(kp, CIN, COUT)

    fwd = jax.jit(separable_conv_block_pallas)
    out = jax.block_until_ready(fwd(x, params))
    assert out.shape == (N, COUT, H, W)
    out_f32 = out.astype(jnp.float32)

    # Tight check vs. a reference using the SAME bf16 casts / accumulation order.
    ref_m = separable_conv_block_ref_matched(x, params).astype(jnp.float32)
    err_m = float(jnp.max(jnp.abs(out_f32 - ref_m)))
    assert jnp.allclose(out_f32, ref_m, atol=2e-2, rtol=2e-2), err_m

    # Semantics check vs. the exact f32 PyTorch-equivalent path (bf16-level tolerance).
    ref = separable_conv_block_ref_f32(x, params)
    err = float(jnp.max(jnp.abs(out_f32 - ref)))
    assert jnp.allclose(out_f32, ref, atol=6e-2, rtol=6e-2), err

    print("KERNEL_OK")
</pallas_src>

<mosaic_0001>
module attributes {stable_mosaic.version = 11 : i64} {
  func.func @_sep_conv_kernel(%arg0: i32, %arg1: memref<1x18x18x64xbf16, #tpu.memory_space<vmem>>, %arg2: memref<9x64xf32, #tpu.memory_space<vmem>>, %arg3: memref<88x64xbf16, #tpu.memory_space<vmem>>, %arg4: memref<88x1xf32, #tpu.memory_space<vmem>>, %arg5: memref<1x88x256xbf16, #tpu.memory_space<vmem>>) attributes {dimension_semantics = [#tpu.dimension_semantics<parallel>], iteration_bounds = array<i64: 2>, scalar_prefetch = 0 : i64, scratch_operands = 0 : i64, tpu.core_type = #tpu.core_type<tc>, window_params = [{transform_indices = @transform_0, window_bounds = array<i64: 1, 18, 18, 64>}, {pipeline_mode = #tpu.pipeline_mode<synchronous>, transform_indices = @transform_1, window_bounds = array<i64: 9, 64>}, {pipeline_mode = #tpu.pipeline_mode<synchronous>, transform_indices = @transform_2, window_bounds = array<i64: 88, 64>}, {pipeline_mode = #tpu.pipeline_mode<synchronous>, transform_indices = @transform_3, window_bounds = array<i64: 88, 1>}, {transform_indices = @transform_4, window_bounds = array<i64: 1, 88, 256>}]} {
    %c0 = arith.constant 0 : index
    %c0_0 = arith.constant 0 : index
    %0 = vector.load %arg2[%c0, %c0_0] : memref<9x64xf32, #tpu.memory_space<vmem>>, vector<9x64xf32>
    %cst = arith.constant 0.000000e+00 : f32
    %1 = vector.broadcast %cst : f32 to vector<16x16x64xf32>
    %c0_1 = arith.constant 0 : index
    %c0_2 = arith.constant 0 : index
    %c0_3 = arith.constant 0 : index
    %c0_4 = arith.constant 0 : index
    %2 = vector.load %arg1[%c0_1, %c0_2, %c0_3, %c0_4] : memref<1x18x18x64xbf16, #tpu.memory_space<vmem>>, vector<1x18x16x64xbf16>
    %3 = vector.shape_cast %2 : vector<1x18x16x64xbf16> to vector<18x16x64xbf16>
    %4 = arith.extf %3 : vector<18x16x64xbf16> to vector<18x16x64xf32>
    %5 = vector.extract_strided_slice %4 {offsets = [0, 0, 0], sizes = [16, 16, 64], strides = [1, 1, 1]} : vector<18x16x64xf32> to vector<16x16x64xf32>
    %6 = vector.extract_strided_slice %0 {offsets = [0, 0], sizes = [1, 64], strides = [1, 1]} : vector<9x64xf32> to vector<1x64xf32>
    %7 = vector.shape_cast %6 : vector<1x64xf32> to vector<64xf32>
    %8 = vector.shape_cast %7 : vector<64xf32> to vector<1x1x64xf32>
    %9 = vector.broadcast %8 : vector<1x1x64xf32> to vector<16x16x64xf32>
    %10 = arith.mulf %5, %9 : vector<16x16x64xf32>
    %11 = arith.addf %1, %10 : vector<16x16x64xf32>
    %12 = vector.extract_strided_slice %4 {offsets = [1, 0, 0], sizes = [16, 16, 64], strides = [1, 1, 1]} : vector<18x16x64xf32> to vector<16x16x64xf32>
    %13 = vector.extract_strided_slice %0 {offsets = [3, 0], sizes = [1, 64], strides = [1, 1]} : vector<9x64xf32> to vector<1x64xf32>
    %14 = vector.shape_cast %13 : vector<1x64xf32> to vector<64xf32>
    %15 = vector.shape_cast %14 : vector<64xf32> to vector<1x1x64xf32>
    %16 = vector.broadcast %15 : vector<1x1x64xf32> to vector<16x16x64xf32>
    %17 = arith.mulf %12, %16 : vector<16x16x64xf32>
    %18 = arith.addf %11, %17 : vector<16x16x64xf32>
    %19 = vector.extract_strided_slice %4 {offsets = [2, 0, 0], sizes = [16, 16, 64], strides = [1, 1, 1]} : vector<18x16x64xf32> to vector<16x16x64xf32>
    %20 = vector.extract_strided_slice %0 {offsets = [6, 0], sizes = [1, 64], strides = [1, 1]} : vector<9x64xf32> to vector<1x64xf32>
    %21 = vector.shape_cast %20 : vector<1x64xf32> to vector<64xf32>
    %22 = vector.shape_cast %21 : vector<64xf32> to vector<1x1x64xf32>
    %23 = vector.broadcast %22 : vector<1x1x64xf32> to vector<16x16x64xf32>
    %24 = arith.mulf %19, %23 : vector<16x16x64xf32>
    %25 = arith.addf %18, %24 : vector<16x16x64xf32>
    %c0_5 = arith.constant 0 : index
    %c0_6 = arith.constant 0 : index
    %c1 = arith.constant 1 : index
    %c0_7 = arith.constant 0 : index
    %26 = vector.load %arg1[%c0_5, %c0_6, %c1, %c0_7] : memref<1x18x18x64xbf16, #tpu.memory_space<vmem>>, vector<1x18x16x64xbf16>
    %27 = vector.shape_cast %26 : vector<1x18x16x64xbf16> to vector<18x16x64xbf16>
    %28 = arith.extf %27 : vector<18x16x64xbf16> to vector<18x16x64xf32>
    %29 = vector.extract_strided_slice %28 {offsets = [0, 0, 0], sizes = [16, 16, 64], strides = [1, 1, 1]} : vector<18x16x64xf32> to vector<16x16x64xf32>
    %30 = vector.extract_strided_slice %0 {offsets = [1, 0], sizes = [1, 64], strides = [1, 1]} : vector<9x64xf32> to vector<1x64xf32>
    %31 = vector.shape_cast %30 : vector<1x64xf32> to vector<64xf32>
    %32 = vector.shape_cast %31 : vector<64xf32> to vector<1x1x64xf32>
    %33 = vector.broadcast %32 : vector<1x1x64xf32> to vector<16x16x64xf32>
    %34 = arith.mulf %29, %33 : vector<16x16x64xf32>
    %35 = arith.addf %25, %34 : vector<16x16x64xf32>
    %36 = vector.extract_strided_slice %28 {offsets = [1, 0, 0], sizes = [16, 16, 64], strides = [1, 1, 1]} : vector<18x16x64xf32> to vector<16x16x64xf32>
    %37 = vector.extract_strided_slice %0 {offsets = [4, 0], sizes = [1, 64], strides = [1, 1]} : vector<9x64xf32> to vector<1x64xf32>
    %38 = vector.shape_cast %37 : vector<1x64xf32> to vector<64xf32>
    %39 = vector.shape_cast %38 : vector<64xf32> to vector<1x1x64xf32>
    %40 = vector.broadcast %39 : vector<1x1x64xf32> to vector<16x16x64xf32>
    %41 = arith.mulf %36, %40 : vector<16x16x64xf32>
    %42 = arith.addf %35, %41 : vector<16x16x64xf32>
    %43 = vector.extract_strided_slice %28 {offsets = [2, 0, 0], sizes = [16, 16, 64], strides = [1, 1, 1]} : vector<18x16x64xf32> to vector<16x16x64xf32>
    %44 = vector.extract_strided_slice %0 {offsets = [7, 0], sizes = [1, 64], strides = [1, 1]} : vector<9x64xf32> to vector<1x64xf32>
    %45 = vector.shape_cast %44 : vector<1x64xf32> to vector<64xf32>
    %46 = vector.shape_cast %45 : vector<64xf32> to vector<1x1x64xf32>
    %47 = vector.broadcast %46 : vector<1x1x64xf32> to vector<16x16x64xf32>
    %48 = arith.mulf %43, %47 : vector<16x16x64xf32>
    %49 = arith.addf %42, %48 : vector<16x16x64xf32>
    %c0_8 = arith.constant 0 : index
    %c0_9 = arith.constant 0 : index
    %c2 = arith.constant 2 : index
    %c0_10 = arith.constant 0 : index
    %50 = vector.load %arg1[%c0_8, %c0_9, %c2, %c0_10] : memref<1x18x18x64xbf16, #tpu.memory_space<vmem>>, vector<1x18x16x64xbf16>
    %51 = vector.shape_cast %50 : vector<1x18x16x64xbf16> to vector<18x16x64xbf16>
    %52 = arith.extf %51 : vector<18x16x64xbf16> to vector<18x16x64xf32>
    %53 = vector.extract_strided_slice %52 {offsets = [0, 0, 0], sizes = [16, 16, 64], strides = [1, 1, 1]} : vector<18x16x64xf32> to vector<16x16x64xf32>
    %54 = vector.extract_strided_slice %0 {offsets = [2, 0], sizes = [1, 64], strides = [1, 1]} : vector<9x64xf32> to vector<1x64xf32>
    %55 = vector.shape_cast %54 : vector<1x64xf32> to vector<64xf32>
    %56 = vector.shape_cast %55 : vector<64xf32> to vector<1x1x64xf32>
    %57 = vector.broadcast %56 : vector<1x1x64xf32> to vector<16x16x64xf32>
    %58 = arith.mulf %53, %57 : vector<16x16x64xf32>
    %59 = arith.addf %49, %58 : vector<16x16x64xf32>
    %60 = vector.extract_strided_slice %52 {offsets = [1, 0, 0], sizes = [16, 16, 64], strides = [1, 1, 1]} : vector<18x16x64xf32> to vector<16x16x64xf32>
    %61 = vector.extract_strided_slice %0 {offsets = [5, 0], sizes = [1, 64], strides = [1, 1]} : vector<9x64xf32> to vector<1x64xf32>
    %62 = vector.shape_cast %61 : vector<1x64xf32> to vector<64xf32>
    %63 = vector.shape_cast %62 : vector<64xf32> to vector<1x1x64xf32>
    %64 = vector.broadcast %63 : vector<1x1x64xf32> to vector<16x16x64xf32>
    %65 = arith.mulf %60, %64 : vector<16x16x64xf32>
    %66 = arith.addf %59, %65 : vector<16x16x64xf32>
    %67 = vector.extract_strided_slice %52 {offsets = [2, 0, 0], sizes = [16, 16, 64], strides = [1, 1, 1]} : vector<18x16x64xf32> to vector<16x16x64xf32>
    %68 = vector.extract_strided_slice %0 {offsets = [8, 0], sizes = [1, 64], strides = [1, 1]} : vector<9x64xf32> to vector<1x64xf32>
    %69 = vector.shape_cast %68 : vector<1x64xf32> to vector<64xf32>
    %70 = vector.shape_cast %69 : vector<64xf32> to vector<1x1x64xf32>
    %71 = vector.broadcast %70 : vector<1x1x64xf32> to vector<16x16x64xf32>
    %72 = arith.mulf %67, %71 : vector<16x16x64xf32>
    %73 = arith.addf %66, %72 : vector<16x16x64xf32>
    %74 = vector.shape_cast %73 : vector<16x16x64xf32> to vector<256x64xf32>
    %75 = arith.truncf %74 : vector<256x64xf32> to vector<256x64xbf16>
    %c0_11 = arith.constant 0 : index
    %c0_12 = arith.constant 0 : index
    %76 = vector.load %arg3[%c0_11, %c0_12] : memref<88x64xbf16, #tpu.memory_space<vmem>>, vector<88x64xbf16>
    %cst_13 = arith.constant dense<0.000000e+00> : vector<88x256xf32>
    %77 = tpu.matmul %76, %75, %cst_13 {dimension_numbers = #tpu.dot_dimension_numbers<[1], [1], [0], [0], [0, 0, 1, 0], [], []>} : vector<88x64xbf16>, vector<256x64xbf16>, vector<88x256xf32> -> vector<88x256xf32>
    %c0_14 = arith.constant 0 : index
    %c0_15 = arith.constant 0 : index
    %78 = vector.load %arg4[%c0_14, %c0_15] : memref<88x1xf32, #tpu.memory_space<vmem>>, vector<88x1xf32>
    %79 = vector.broadcast %78 : vector<88x1xf32> to vector<88x256xf32>
    %80 = arith.addf %77, %79 : vector<88x256xf32>
    %81 = arith.truncf %80 : vector<88x256xf32> to vector<88x256xbf16>
    %c0_16 = arith.constant 0 : index
    %c0_17 = arith.constant 0 : index
    %c0_18 = arith.constant 0 : index
    %82 = vector.load %arg5[%c0_16, %c0_17, %c0_18] : memref<1x88x256xbf16, #tpu.memory_space<vmem>>, vector<1x88x256xbf16>
    %83 = vector.shape_cast %82 : vector<1x88x256xbf16> to vector<88x256xbf16>
    %84 = vector.shape_cast %81 : vector<88x256xbf16> to vector<1x88x256xbf16>
    tpu.vector_store %arg5[%c0_16, %c0_17, %c0_18], %84 {strides = array<i32>} : memref<1x88x256xbf16, #tpu.memory_space<vmem>>, vector<1x88x256xbf16>,
    return
  }
  func.func @transform_0(%arg0: i32) -> (i32, i32, i32, i32) {
    %c0_i32 = arith.constant 0 : i32
    %c0_i32_0 = arith.constant 0 : i32
    %c0_i32_1 = arith.constant 0 : i32
    %c0_i32_2 = arith.constant 0 : i32
    return %arg0, %c0_i32, %c0_i32_0, %c0_i32_1 : i32, i32, i32, i32
  }
  func.func @transform_1(%arg0: i32) -> (i32, i32) {
    %c0_i32 = arith.constant 0 : i32
    %c0_i32_0 = arith.constant 0 : i32
    %c0_i32_1 = arith.constant 0 : i32
    return %c0_i32, %c0_i32_0 : i32, i32
  }
  func.func @transform_2(%arg0: i32) -> (i32, i32) {
    %c0_i32 = arith.constant 0 : i32
    %c0_i32_0 = arith.constant 0 : i32
    %c0_i32_1 = arith.constant 0 : i32
    return %c0_i32, %c0_i32_0 : i32, i32
  }
  func.func @transform_3(%arg0: i32) -> (i32, i32) {
    %c0_i32 = arith.constant 0 : i32
    %c0_i32_0 = arith.constant 0 : i32
    %c0_i32_1 = arith.constant 0 : i32
    return %c0_i32, %c0_i32_0 : i32, i32
  }
  func.func @transform_4(%arg0: i32) -> (i32, i32, i32) {
    %c0_i32 = arith.constant 0 : i32
    %c0_i32_0 = arith.constant 0 : i32
    %c0_i32_1 = arith.constant 0 : i32
    return %arg0, %c0_i32, %c0_i32_0 : i32, i32, i32
  }
}

</mosaic_0001>

<llo_original>
// kernel: separable_conv_block_pallas.1
$region0: #{separable_conv_block_pallas.1}
  #allocation0 [shape = 'u32[]', space=smem, size = 0x4, offset = 0x4, fixed_abs, tag = 'smem constant byte address 0x4 - core index']
  #allocation1 [shape = 'u32[144,128]{1,0:T(1,128)}', space=vmem, size = 0x12000, scoped, tag = 'internal scratch']
  %s0 = inlined_call_operand.vmem [shape: bf16[2,18,18,64], index: 0, kind: input, shape index: {}]
  %s1 = inlined_call_operand.vmem [shape: f32[9,64], index: 1, kind: input, shape index: {}]
  %s2 = inlined_call_operand.vmem [shape: bf16[88,64], index: 2, kind: input, shape index: {}]
  %s3 = inlined_call_operand.vmem [shape: f32[88,1], index: 3, kind: input, shape index: {}]
  %s4 = inlined_call_operand.vmem [shape: bf16[2,88,256], index: 4, kind: output, shape index: {}]
  %s5 = sld [smem:[#allocation0]]
  $region49: #{separable_conv_block_pallas.1} parent=0
    _
  %s7 = ssub.s32 1, %s5
  %s8 = scalar_select 0, %s7, %s5
  loop: start=0, step=1, limit=4
  $region2: #{separable_conv_block_pallas.1} parent=0 // loop_pre_header
    _
  $region3: #{separable_conv_block_pallas.1} parent=0 // loop_header
    %s10 = sphi 0, %s14
    %p11 = scmp.ge.s32.totalorder %s10, 4
    %s20 = sphi 0, %s22
    %s23 = sphi 0, %s20
    %s24 = sphi 0, %s23
    %s40 = sphi 0, %s24
    %s44 = sphi 0, %s44
    %s46 = sphi 0, %s44
    %s47 = sphi 0, %s46
    %s61 = sphi 0, %s47
    %s65 = sphi 0, %s65
    %s67 = sphi 0, %s65
    %s68 = sphi 0, %s67
    %s82 = sphi 0, %s68
    %s86 = sphi 0, %s86
    %s88 = sphi 0, %s86
    %s89 = sphi 0, %s88
    %s103 = sphi 0, %s89
    %s109 = sphi 0, %s111
    %s112 = sphi 0, %s109
    %s113 = sphi 0, %s112
    %s129 = sphi 0, %s113
  $region4: #{separable_conv_block_pallas.1} parent=0 // loop_header_branch
    %13 = sbr.rel (%p11) target = $region8
  $region5: #{separable_conv_block_pallas.1} parent=0 // loop_body
    %s15 = ssub.s32 %s10, 1
    %s16 = ssub.s32 %s10, 2
    %s17 = sadd.s32 %s10, 1
    %s18 = ssub.s32 %s10, %s17
    %p19 = scmp.eq.s32.totalorder %s18, 0
    %s21 = sadd.s32 %s20, 1
    %s22 = scalar_select %p19, %s20, %s21
    %p25 = pneg %p19
    %p26 = scmp.eq.s32.totalorder %s10, 1
    %p27 = por %p25, %p26
    %p28 = scmp.ne.s32.totalorder %s20, %s23
    %p29 = scmp.eq.s32.totalorder %s10, 0
    %p30 = por %p28, %p29
    %p31 = scmp.ne.s32.totalorder %s20, %s23
    %p32 = scmp.eq.s32.totalorder %s15, 1
    %p33 = por %p31, %p32
    %p34 = scmp.ne.s32.totalorder %s23, %s24
    %p35 = scmp.eq.s32.totalorder %s15, 0
    %p36 = por %p34, %p35
    %p37 = scmp.ne.s32.totalorder %s23, %s24
    %p38 = scmp.eq.s32.totalorder %s16, 1
    %p39 = por %p37, %p38
    %p41 = scmp.ne.s32.totalorder %s24, %s40
    %p42 = scmp.eq.s32.totalorder %s16, 0
    %p43 = por %p41, %p42
    %s45 = sadd.s32 %s44, 1
    %p48 = scmp.eq.s32.totalorder %s10, 1
    %p49 = scmp.ne.s32.totalorder %s44, %s46
    %p50 = scmp.eq.s32.totalorder %s10, 0
    %p51 = por %p49, %p50
    %p52 = scmp.ne.s32.totalorder %s44, %s46
    %p53 = scmp.eq.s32.totalorder %s15, 1
    %p54 = por %p52, %p53
    %p55 = scmp.ne.s32.totalorder %s46, %s47
    %p56 = scmp.eq.s32.totalorder %s15, 0
    %p57 = por %p55, %p56
    %p58 = scmp.ne.s32.totalorder %s46, %s47
    %p59 = scmp.eq.s32.totalorder %s16, 1
    %p60 = por %p58, %p59
    %p62 = scmp.ne.s32.totalorder %s47, %s61
    %p63 = scmp.eq.s32.totalorder %s16, 0
    %p64 = por %p62, %p63
    %s66 = sadd.s32 %s65, 1
    %p69 = scmp.eq.s32.totalorder %s10, 1
    %p70 = scmp.ne.s32.totalorder %s65, %s67
    %p71 = scmp.eq.s32.totalorder %s10, 0
    %p72 = por %p70, %p71
    %p73 = scmp.ne.s32.totalorder %s65, %s67
    %p74 = scmp.eq.s32.totalorder %s15, 1
    %p75 = por %p73, %p74
    %p76 = scmp.ne.s32.totalorder %s67, %s68
    %p77 = scmp.eq.s32.totalorder %s15, 0
    %p78 = por %p76, %p77
    %p79 = scmp.ne.s32.totalorder %s67, %s68
    %p80 = scmp.eq.s32.totalorder %s16, 1
    %p81 = por %p79, %p80
    %p83 = scmp.ne.s32.totalorder %s68, %s82
    %p84 = scmp.eq.s32.totalorder %s16, 0
    %p85 = por %p83, %p84
    %s87 = sadd.s32 %s86, 1
    %p90 = scmp.eq.s32.totalorder %s10, 1
    %p91 = scmp.ne.s32.totalorder %s86, %s88
    %p92 = scmp.eq.s32.totalorder %s10, 0
    %p93 = por %p91, %p92
    %p94 = scmp.ne.s32.totalorder %s86, %s88
    %p95 = scmp.eq.s32.totalorder %s15, 1
    %p96 = por %p94, %p95
    %p97 = scmp.ne.s32.totalorder %s88, %s89
    %p98 = scmp.eq.s32.totalorder %s15, 0
    %p99 = por %p97, %p98
    %p100 = scmp.ne.s32.totalorder %s88, %s89
    %p101 = scmp.eq.s32.totalorder %s16, 1
    %p102 = por %p100, %p101
    %p104 = scmp.ne.s32.totalorder %s89, %s103
    %p105 = scmp.eq.s32.totalorder %s16, 0
    %p106 = por %p104, %p105
    %s107 = ssub.s32 %s10, %s17
    %p108 = scmp.eq.s32.totalorder %s107, 0
    %s110 = sadd.s32 %s109, 1
    %s111 = scalar_select %p108, %s109, %s110
    %p114 = pneg %p108
    %p115 = scmp.eq.s32.totalorder %s10, 1
    %p116 = por %p114, %p115
    %p117 = scmp.ne.s32.totalorder %s109, %s112
    %p118 = scmp.eq.s32.totalorder %s10, 0
    %p119 = por %p117, %p118
    %p120 = scmp.ne.s32.totalorder %s109, %s112
    %p121 = scmp.eq.s32.totalorder %s15, 1
    %p122 = por %p120, %p121
    %p123 = scmp.ne.s32.totalorder %s112, %s113
    %p124 = scmp.eq.s32.totalorder %s15, 0
    %p125 = por %p123, %p124
    %p126 = scmp.ne.s32.totalorder %s112, %s113
    %p127 = scmp.eq.s32.totalorder %s16, 1
    %p128 = por %p126, %p127
    %p130 = scmp.ne.s32.totalorder %s113, %s129
    %p131 = scmp.eq.s32.totalorder %s16, 0
    %p132 = por %p130, %p131
    %p133 = scmp.le.s32.totalorder 1, %s10
    %p134 = scmp.lt.s32.totalorder %s10, 3
    %p135 = pnand %p133, %p134
    %p136 = pneg %p135
    // Predicated region
    $region9: #{separable_conv_block_pallas.1} parent=5 // pred_check
      _
    $region10: #{separable_conv_block_pallas.1} parent=5 // pred_check_branch
      %138 = sbr.rel (%p135) target = $region12
    $region11: #{separable_conv_block_pallas.1} parent=5 // pred_region
      %s139 = ssub.s32 %s10, 1
      // Predicated region
      $region13: #{separable_conv_block_pallas.1} parent=11 // pred_check
        %p140 = pneg %p57
      $region14: #{separable_conv_block_pallas.1} parent=11 // pred_check_branch
        %142 = sbr.rel (%p140) target = $region16
      $region15: #{separable_conv_block_pallas.1} parent=11 // pred_region
        _
      $region16: #{separable_conv_block_pallas.1} parent=11 // pred_fallthru
        _
      // Predicated region
      $region17: #{separable_conv_block_pallas.1} parent=11 // pred_check
        %p143 = pneg %p78
      $region18: #{separable_conv_block_pallas.1} parent=11 // pred_check_branch
        %145 = sbr.rel (%p143) target = $region20
      $region19: #{separable_conv_block_pallas.1} parent=11 // pred_region
        _
      $region20: #{separable_conv_block_pallas.1} parent=11 // pred_fallthru
        _
      // Predicated region
      $region21: #{separable_conv_block_pallas.1} parent=11 // pred_check
        %p146 = pneg %p99
      $region22: #{separable_conv_block_pallas.1} parent=11 // pred_check_branch
        %148 = sbr.rel (%p146) target = $region24
      $region23: #{separable_conv_block_pallas.1} parent=11 // pred_region
        _
      $region24: #{separable_conv_block_pallas.1} parent=11 // pred_fallthru
        _
    $region12: #{separable_conv_block_pallas.1} parent=5 // pred_fallthru
      _
    %p149 = scmp.lt.s32.totalorder %s10, 2
    // Predicated region
    $region25: #{separable_conv_block_pallas.1} parent=5 // pred_check
      %p150 = pneg %p149
    $region26: #{separable_conv_block_pallas.1} parent=5 // pred_check_branch
      %152 = sbr.rel (%p150) target = $region28
    $region27: #{separable_conv_block_pallas.1} parent=5 // pred_region
      // Predicated region
      $region29: #{separable_conv_block_pallas.1} parent=27 // pred_check
        %p153 = pneg %p30
      $region30: #{separable_conv_block_pallas.1} parent=27 // pred_check_branch
        %155 = sbr.rel (%p153) target = $region32
      $region31: #{separable_conv_block_pallas.1} parent=27 // pred_region
        %p156 = scmp.lt.s32.totalorder %s10, 1
        %s157 = scalar_select %p156, %s10, 1
        %s158 = smul.addr %s157, 54
        %s159 = smul.addr %s158, 4
        %s160 = scalar_lea.vmem %s0, %s159
      $region32: #{separable_conv_block_pallas.1} parent=27 // pred_fallthru
        _
    $region28: #{separable_conv_block_pallas.1} parent=5 // pred_fallthru
      _
    %p161 = scmp.le.s32.totalorder 1, %s10
    %p162 = scmp.lt.s32.totalorder %s10, 3
    %p163 = pnand %p161, %p162
    %p164 = pneg %p163
    // Predicated region
    $region33: #{separable_conv_block_pallas.1} parent=5 // pred_check
      _
    $region34: #{separable_conv_block_pallas.1} parent=5 // pred_check_branch
      %166 = sbr.rel (%p163) target = $region36
    $region35: #{separable_conv_block_pallas.1} parent=5 // pred_region
      %s167 = ssub.s32 %s10, 1
      %p168 = scmp.lt.s32.totalorder %s15, 1
      %s169 = scalar_select %p168, %s15, 1
      %s170 = smul.addr %s169, 54
      %s171 = smul.addr %s170, 4
      %s172 = scalar_lea.vmem %s0, %s171
      %p173 = pneg %p36
      %p174 = pneg %p33
      %p175 = pneg %p57
      %p176 = pneg %p54
      %p177 = pneg %p78
      %p178 = pneg %p75
      %p179 = pneg %p99
      %p180 = pneg %p96
      %p181 = pneg %p125
      %p182 = pneg %p122
      %p183 = scmp.lt.s32.totalorder %s15, 1
      %s184 = scalar_select %p183, %s15, 1
      %s185 = smul.addr %s184, 22
      %s186 = smul.addr %s185, 4
      %s187 = scalar_lea.vmem %s4, %s186
      %p188 = scmp.lt.s32.totalorder %s15, 1
      %s189 = scalar_select %p188, %s15, 1
      %s190 = smul.addr %s189, 54
      %s191 = smul.addr %s190, 4
      %s192 = scalar_lea.vmem %s0, %s191
      %p193 = scmp.lt.s32.totalorder %s15, 1
      %s194 = scalar_select %p193, %s15, 1
      %s195 = smul.addr %s194, 22
      %s196 = smul.addr %s195, 4
      %s197 = scalar_lea.vmem %s4, %s196
      %v199 = vld [vmem:[%s1] sm:$0xff]
      %v200 = vld [vmem:[%s1 + $0x8] sm:$0x1]
      %v201 = vld [vmem:[%s192] sm:$0xf]
      %v202 = vld [vmem:[%s192 + $0x4] sm:$0xf]
      %v203 = vld [vmem:[%s192 + $0xc] sm:$0xf]
      %v204 = vld [vmem:[%s192 + $0x10] sm:$0xf]
      %v205 = vld [vmem:[%s192 + $0x18] sm:$0xf]
      %v206 = vld [vmem:[%s192 + $0x1c] sm:$0xf]
      %v207 = vld [vmem:[%s192 + $0x24] sm:$0xf]
      %v208 = vld [vmem:[%s192 + $0x28] sm:$0xf]
      %v209 = vld [vmem:[%s192 + $0x30] sm:$0xf]
      %v210 = vld [vmem:[%s192 + $0x34] sm:$0xf]
      %v211 = vld [vmem:[%s192 + $0x3c] sm:$0xf]
      %v212 = vld [vmem:[%s192 + $0x40] sm:$0xf]
      %v213 = vld [vmem:[%s192 + $0x48] sm:$0xf]
      %v214 = vld [vmem:[%s192 + $0x4c] sm:$0xf]
      %v215 = vld [vmem:[%s192 + $0x54] sm:$0xf]
      %v216 = vld [vmem:[%s192 + $0x58] sm:$0xf]
      %v217 = vld [vmem:[%s192 + $0x60] sm:$0xf]
      %v218 = vld [vmem:[%s192 + $0x64] sm:$0xf]
      %v219 = vld [vmem:[%s192 + $0x6c] sm:$0xf]
      %v220 = vld [vmem:[%s192 + $0x70] sm:$0xf]
      %v221 = vld [vmem:[%s192 + $0x78] sm:$0xf]
      %v222 = vld [vmem:[%s192 + $0x7c] sm:$0xf]
      %v223 = vld [vmem:[%s192 + $0x84] sm:$0xf]
      %v224 = vld [vmem:[%s192 + $0x88] sm:$0xf]
      %v225 = vld [vmem:[%s192 + $0x90] sm:$0xf]
      %v226 = vld [vmem:[%s192 + $0x94] sm:$0xf]
      %v227 = vld [vmem:[%s192 + $0x9c] sm:$0xf]
      %v228 = vld [vmem:[%s192 + $0xa0] sm:$0xf]
      %v229 = vld [vmem:[%s192 + $0xa8] sm:$0xf]
      %v230 = vld [vmem:[%s192 + $0xac] sm:$0xf]
      %v231 = vld [vmem:[%s192 + $0xb4] sm:$0xf]
      %v232 = vld [vmem:[%s192 + $0xb8] sm:$0xf]
      %v233 = vld [vmem:[%s192 + $0xc0] sm:$0xf]
      %v234 = vld [vmem:[%s192 + $0xc4] sm:$0xf]
      %v235 = vld [vmem:[%s192 + $0xcc] sm:$0xf]
      %v236 = vld [vmem:[%s192 + $0xd0] sm:$0xf]
      %v237 = vunpack.c.l.bf16 %v201
      %v238 = vunpack.c.l.bf16 %v202
      %v239 = vunpack.c.l.bf16 %v203
      %v240 = vunpack.c.l.bf16 %v204
      %v241 = vunpack.c.l.bf16 %v205
      %v242 = vunpack.c.l.bf16 %v206
      %v243 = vunpack.c.l.bf16 %v207
      %v244 = vunpack.c.l.bf16 %v208
      %v245 = vunpack.c.l.bf16 %v209
      %v246 = vunpack.c.l.bf16 %v210
      %v247 = vunpack.c.l.bf16 %v211
      %v248 = vunpack.c.l.bf16 %v212
      %v249 = vunpack.c.l.bf16 %v213
      %v250 = vunpack.c.l.bf16 %v214
      %v251 = vunpack.c.l.bf16 %v215
      %v252 = vunpack.c.l.bf16 %v216
      %v253 = vunpack.c.l.bf16 %v217
      %v254 = vunpack.c.l.bf16 %v218
      %v255 = vunpack.c.l.bf16 %v219
      %v256 = vunpack.c.l.bf16 %v220
      %v257 = vunpack.c.l.bf16 %v221
      %v258 = vunpack.c.l.bf16 %v222
      %v259 = vunpack.c.l.bf16 %v223
      %v260 = vunpack.c.l.bf16 %v224
      %v261 = vunpack.c.l.bf16 %v225
      %v262 = vunpack.c.l.bf16 %v226
      %v263 = vunpack.c.l.bf16 %v227
      %v264 = vunpack.c.l.bf16 %v228
      %v265 = vunpack.c.l.bf16 %v229
      %v266 = vunpack.c.l.bf16 %v230
      %v267 = vunpack.c.l.bf16 %v231
      %v268 = vunpack.c.l.bf16 %v232
      %v269 = vunpack.c.l.bf16 %v233
      %v270 = vunpack.c.l.bf16 %v234
      %v271 = vunpack.c.l.bf16 %v235
      %v272 = vunpack.c.l.bf16 %v236
      %v273 = vlaneseq
      %v274 = vshrl.u32 %v273, 7
      %v275 = vsub.s32 0, %v274
      %v276 = vrot.slane %v199, %v275
      %v277 = vmul.f32 %v237, %v276
      %v278 = vmul.f32 %v238, %v276
      %v279 = vmul.f32 %v239, %v276
      %v280 = vmul.f32 %v240, %v276
      %v281 = vmul.f32 %v241, %v276
      %v282 = vmul.f32 %v242, %v276
      %v283 = vmul.f32 %v243, %v276
      %v284 = vmul.f32 %v244, %v276
      %v285 = vmul.f32 %v245, %v276
      %v286 = vmul.f32 %v246, %v276
      %v287 = vmul.f32 %v247, %v276
      %v288 = vmul.f32 %v248, %v276
      %v289 = vmul.f32 %v249, %v276
      %v290 = vmul.f32 %v250, %v276
      %v291 = vmul.f32 %v251, %v276
      %v292 = vmul.f32 %v252, %v276
      %v293 = vmul.f32 %v253, %v276
      %v294 = vmul.f32 %v254, %v276
      %v295 = vmul.f32 %v255, %v276
      %v296 = vmul.f32 %v256, %v276
      %v297 = vmul.f32 %v257, %v276
      %v298 = vmul.f32 %v258, %v276
      %v299 = vmul.f32 %v259, %v276
      %v300 = vmul.f32 %v260, %v276
      %v301 = vmul.f32 %v261, %v276
      %v302 = vmul.f32 %v262, %v276
      %v303 = vmul.f32 %v263, %v276
      %v304 = vmul.f32 %v264, %v276
      %v305 = vmul.f32 %v265, %v276
      %v306 = vmul.f32 %v266, %v276
      %v307 = vmul.f32 %v267, %v276
      %v308 = vmul.f32 %v268, %v276
      %v309 = vadd.f32 %v277, 0.0
      %v310 = vadd.f32 %v278, 0.0
      %v311 = vadd.f32 %v279, 0.0
      %v312 = vadd.f32 %v280, 0.0
      %v313 = vadd.f32 %v281, 0.0
      %v314 = vadd.f32 %v282, 0.0
      %v315 = vadd.f32 %v283, 0.0
      %v316 = vadd.f32 %v284, 0.0
      %v317 = vadd.f32 %v285, 0.0
      %v318 = vadd.f32 %v286, 0.0
      %v319 = vadd.f32 %v287, 0.0
      %v320 = vadd.f32 %v288, 0.0
      %v321 = vadd.f32 %v289, 0.0
      %v322 = vadd.f32 %v290, 0.0
      %v323 = vadd.f32 %v291, 0.0
      %v324 = vadd.f32 %v292, 0.0
      %v325 = vadd.f32 %v293, 0.0
      %v326 = vadd.f32 %v294, 0.0
      %v327 = vadd.f32 %v295, 0.0
      %v328 = vadd.f32 %v296, 0.0
      %v329 = vadd.f32 %v297, 0.0
      %v330 = vadd.f32 %v298, 0.0
      %v331 = vadd.f32 %v299, 0.0
      %v332 = vadd.f32 %v300, 0.0
      %v333 = vadd.f32 %v301, 0.0
      %v334 = vadd.f32 %v302, 0.0
      %v335 = vadd.f32 %v303, 0.0
      %v336 = vadd.f32 %v304, 0.0
      %v337 = vadd.f32 %v305, 0.0
      %v338 = vadd.f32 %v306, 0.0
      %v339 = vadd.f32 %v307, 0.0
      %v340 = vadd.f32 %v308, 0.0
      %v341 = vlaneseq
      %v342 = vshrl.u32 %v341, 7
      %v343 = vsub.s32 3, %v342
      %v344 = vrot.slane %v199, %v343
      %v345 = vmul.f32 %v239, %v344
      %v346 = vmul.f32 %v240, %v344
      %v347 = vmul.f32 %v241, %v344
      %v348 = vmul.f32 %v242, %v344
      %v349 = vmul.f32 %v243, %v344
      %v350 = vmul.f32 %v244, %v344
      %v351 = vmul.f32 %v245, %v344
      %v352 = vmul.f32 %v246, %v344
      %v353 = vmul.f32 %v247, %v344
      %v354 = vmul.f32 %v248, %v344
      %v355 = vmul.f32 %v249, %v344
      %v356 = vmul.f32 %v250, %v344
      %v357 = vmul.f32 %v251, %v344
      %v358 = vmul.f32 %v252, %v344
      %v359 = vmul.f32 %v253, %v344
      %v360 = vmul.f32 %v254, %v344
      %v361 = vmul.f32 %v255, %v344
      %v362 = vmul.f32 %v256, %v344
      %v363 = vmul.f32 %v257, %v344
      %v364 = vmul.f32 %v258, %v344
      %v365 = vmul.f32 %v259, %v344
      %v366 = vmul.f32 %v260, %v344
      %v367 = vmul.f32 %v261, %v344
      %v368 = vmul.f32 %v262, %v344
      %v369 = vmul.f32 %v263, %v344
      %v370 = vmul.f32 %v264, %v344
      %v371 = vmul.f32 %v265, %v344
      %v372 = vmul.f32 %v266, %v344
      %v373 = vmul.f32 %v267, %v344
      %v374 = vmul.f32 %v268, %v344
      %v375 = vmul.f32 %v269, %v344
      %v376 = vmul.f32 %v270, %v344
      %v377 = vadd.f32 %v309, %v345
      %v378 = vadd.f32 %v310, %v346
      %v379 = vadd.f32 %v311, %v347
      %v380 = vadd.f32 %v312, %v348
      %v381 = vadd.f32 %v313, %v349
      %v382 = vadd.f32 %v314, %v350
      %v383 = vadd.f32 %v315, %v351
      %v384 = vadd.f32 %v316, %v352
      %v385 = vadd.f32 %v317, %v353
      %v386 = vadd.f32 %v318, %v354
      %v387 = vadd.f32 %v319, %v355
      %v388 = vadd.f32 %v320, %v356
      %v389 = vadd.f32 %v321, %v357
      %v390 = vadd.f32 %v322, %v358
      %v391 = vadd.f32 %v323, %v359
      %v392 = vadd.f32 %v324, %v360
      %v393 = vadd.f32 %v325, %v361
      %v394 = vadd.f32 %v326, %v362
      %v395 = vadd.f32 %v327, %v363
      %v396 = vadd.f32 %v328, %v364
      %v397 = vadd.f32 %v329, %v365
      %v398 = vadd.f32 %v330, %v366
      %v399 = vadd.f32 %v331, %v367
      %v400 = vadd.f32 %v332, %v368
      %v401 = vadd.f32 %v333, %v369
      %v402 = vadd.f32 %v334, %v370
      %v403 = vadd.f32 %v335, %v371
      %v404 = vadd.f32 %v336, %v372
      %v405 = vadd.f32 %v337, %v373
      %v406 = vadd.f32 %v338, %v374
      %v407 = vadd.f32 %v339, %v375
      %v408 = vadd.f32 %v340, %v376
      %v409 = vlaneseq
      %v410 = vshrl.u32 %v409, 7
      %v411 = vsub.s32 6, %v410
      %v412 = vrot.slane %v199, %v411
      %v413 = vmul.f32 %v241, %v412
      %v414 = vmul.f32 %v242, %v412
      %v415 = vmul.f32 %v243, %v412
      %v416 = vmul.f32 %v244, %v412
      %v417 = vmul.f32 %v245, %v412
      %v418 = vmul.f32 %v246, %v412
      %v419 = vmul.f32 %v247, %v412
      %v420 = vmul.f32 %v248, %v412
      %v421 = vmul.f32 %v249, %v412
      %v422 = vmul.f32 %v250, %v412
      %v423 = vmul.f32 %v251, %v412
      %v424 = vmul.f32 %v252, %v412
      %v425 = vmul.f32 %v253, %v412
      %v426 = vmul.f32 %v254, %v412
      %v427 = vmul.f32 %v255, %v412
      %v428 = vmul.f32 %v256, %v412
      %v429 = vmul.f32 %v257, %v412
      %v430 = vmul.f32 %v258, %v412
      %v431 = vmul.f32 %v259, %v412
      %v432 = vmul.f32 %v260, %v412
      %v433 = vmul.f32 %v261, %v412
      %v434 = vmul.f32 %v262, %v412
      %v435 = vmul.f32 %v263, %v412
      %v436 = vmul.f32 %v264, %v412
      %v437 = vmul.f32 %v265, %v412
      %v438 = vmul.f32 %v266, %v412
      %v439 = vmul.f32 %v267, %v412
      %v440 = vmul.f32 %v268, %v412
      %v441 = vmul.f32 %v269, %v412
      %v442 = vmul.f32 %v270, %v412
      %v443 = vmul.f32 %v271, %v412
      %v444 = vmul.f32 %v272, %v412
      %v445 = vadd.f32 %v377, %v413
      %v446 = vadd.f32 %v378, %v414
      %v447 = vadd.f32 %v379, %v415
      %v448 = vadd.f32 %v380, %v416
      %v449 = vadd.f32 %v381, %v417
      %v450 = vadd.f32 %v382, %v418
      %v451 = vadd.f32 %v383, %v419
      %v452 = vadd.f32 %v384, %v420
      %v453 = vadd.f32 %v385, %v421
      %v454 = vadd.f32 %v386, %v422
      %v455 = vadd.f32 %v387, %v423
      %v456 = vadd.f32 %v388, %v424
      %v457 = vadd.f32 %v389, %v425
      %v458 = vadd.f32 %v390, %v426
      %v459 = vadd.f32 %v391, %v427
      %v460 = vadd.f32 %v392, %v428
      %v461 = vadd.f32 %v393, %v429
      %v462 = vadd.f32 %v394, %v430
      %v463 = vadd.f32 %v395, %v431
      %v464 = vadd.f32 %v396, %v432
      %v465 = vadd.f32 %v397, %v433
      %v466 = vadd.f32 %v398, %v434
      %v467 = vadd.f32 %v399, %v435
      %v468 = vadd.f32 %v400, %v436
      %v469 = vadd.f32 %v401, %v437
      %v470 = vadd.f32 %v402, %v438
      %v471 = vadd.f32 %v403, %v439
      %v472 = vadd.f32 %v404, %v440
      %v473 = vadd.f32 %v405, %v441
      %v474 = vadd.f32 %v406, %v442
      %v475 = vadd.f32 %v407, %v443
      %v476 = vadd.f32 %v408, %v444
      %v477 = vld [vmem:[%s192 + $0x8] sm:$0x1]
      %v478 = vld [vmem:[%s192 + $0x14] sm:$0x1]
      %v479 = vld [vmem:[%s192 + $0x20] sm:$0x1]
      %v480 = vld [vmem:[%s192 + $0x2c] sm:$0x1]
      %v481 = vld [vmem:[%s192 + $0x38] sm:$0x1]
      %v482 = vld [vmem:[%s192 + $0x44] sm:$0x1]
      %v483 = vld [vmem:[%s192 + $0x50] sm:$0x1]
      %v484 = vld [vmem:[%s192 + $0x5c] sm:$0x1]
      %v485 = vld [vmem:[%s192 + $0x68] sm:$0x1]
      %v486 = vld [vmem:[%s192 + $0x74] sm:$0x1]
      %v487 = vld [vmem:[%s192 + $0x80] sm:$0x1]
      %v488 = vld [vmem:[%s192 + $0x8c] sm:$0x1]
      %v489 = vld [vmem:[%s192 + $0x98] sm:$0x1]
      %v490 = vld [vmem:[%s192 + $0xa4] sm:$0x1]
      %v491 = vld [vmem:[%s192 + $0xb0] sm:$0x1]
      %v492 = vld [vmem:[%s192 + $0xbc] sm:$0x1]
      %v493 = vld [vmem:[%s192 + $0xc8] sm:$0x1]
      %v494 = vld [vmem:[%s192 + $0xd4] sm:$0x1]
      %v495 = vunpack.c.l.bf16 %v477
      %v496 = vunpack.c.l.bf16 %v478
      %v497 = vunpack.c.l.bf16 %v479
      %v498 = vunpack.c.l.bf16 %v480
      %v499 = vunpack.c.l.bf16 %v481
      %v500 = vunpack.c.l.bf16 %v482
      %v501 = vunpack.c.l.bf16 %v483
      %v502 = vunpack.c.l.bf16 %v484
      %v503 = vunpack.c.l.bf16 %v485
      %v504 = vunpack.c.l.bf16 %v486
      %v505 = vunpack.c.l.bf16 %v487
      %v506 = vunpack.c.l.bf16 %v488
      %v507 = vunpack.c.l.bf16 %v489
      %v508 = vunpack.c.l.bf16 %v490
      %v509 = vunpack.c.l.bf16 %v491
      %v510 = vunpack.c.l.bf16 %v492
      %v511 = vunpack.c.l.bf16 %v493
      %v512 = vunpack.c.l.bf16 %v494
      %v513 = vlaneseq
      %v514 = vshrl.u32 %v513, 7
      %v515 = vsub.s32 1, %v514
      %v516 = vrot.slane %v199, %v515
      %v517 = vmul.f32 %v237, %v516
      %v518 = vmul.f32 %v238, %v516
      %v519 = vmul.f32 %v495, %v516
      %v520 = vmul.f32 %v239, %v516
      %v521 = vmul.f32 %v240, %v516
      %v522 = vmul.f32 %v496, %v516
      %v523 = vmul.f32 %v241, %v516
      %v524 = vmul.f32 %v242, %v516
      %v525 = vmul.f32 %v497, %v516
      %v526 = vmul.f32 %v243, %v516
      %v527 = vmul.f32 %v244, %v516
      %v528 = vmul.f32 %v498, %v516
      %v529 = vmul.f32 %v245, %v516
      %v530 = vmul.f32 %v246, %v516
      %v531 = vmul.f32 %v499, %v516
      %v532 = vmul.f32 %v247, %v516
      %v533 = vmul.f32 %v248, %v516
      %v534 = vmul.f32 %v500, %v516
      %v535 = vmul.f32 %v249, %v516
      %v536 = vmul.f32 %v250, %v516
      %v537 = vmul.f32 %v501, %v516
      %v538 = vmul.f32 %v251, %v516
      %v539 = vmul.f32 %v252, %v516
      %v540 = vmul.f32 %v502, %v516
      %v541 = vmul.f32 %v253, %v516
      %v542 = vmul.f32 %v254, %v516
      %v543 = vmul.f32 %v503, %v516
      %v544 = vmul.f32 %v255, %v516
      %v545 = vmul.f32 %v256, %v516
      %v546 = vmul.f32 %v504, %v516
      %v547 = vmul.f32 %v257, %v516
      %v548 = vmul.f32 %v258, %v516
      %v549 = vmul.f32 %v505, %v516
      %v550 = vmul.f32 %v259, %v516
      %v551 = vmul.f32 %v260, %v516
      %v552 = vmul.f32 %v506, %v516
      %v553 = vmul.f32 %v261, %v516
      %v554 = vmul.f32 %v262, %v516
      %v555 = vmul.f32 %v507, %v516
      %v556 = vmul.f32 %v263, %v516
      %v557 = vmul.f32 %v264, %v516
      %v558 = vmul.f32 %v508, %v516
      %v559 = vmul.f32 %v265, %v516
      %v560 = vmul.f32 %v266, %v516
      %v561 = vmul.f32 %v509, %v516
      %v562 = vmul.f32 %v267, %v516
      %v563 = vmul.f32 %v268, %v516
      %v564 = vmul.f32 %v510, %v516
      %vm613 = vcmask 1046528
      %v614 = vrot.slane %v517, 1
      %v615 = vrot.slane %v518, 1
      %v616 = vsel %vm613, %v614, %v615
      %v617 = vrot.slane %v519, 1
      %v618 = vsel %vm613, %v615, %v617
      %v619 = vrot.slane %v520, 1
      %v620 = vrot.slane %v521, 1
      %v621 = vsel %vm613, %v619, %v620
      %v622 = vrot.slane %v522, 1
      %v623 = vsel %vm613, %v620, %v622
      %v624 = vrot.slane %v523, 1
      %v625 = vrot.slane %v524, 1
      %v626 = vsel %vm613, %v624, %v625
      %v627 = vrot.slane %v525, 1
      %v628 = vsel %vm613, %v625, %v627
      %v629 = vrot.slane %v526, 1
      %v630 = vrot.slane %v527, 1
      %v631 = vsel %vm613, %v629, %v630
      %v632 = vrot.slane %v528, 1
      %v633 = vsel %vm613, %v630, %v632
      %v634 = vrot.slane %v529, 1
      %v635 = vrot.slane %v530, 1
      %v636 = vsel %vm613, %v634, %v635
      %v637 = vrot.slane %v531, 1
      %v638 = vsel %vm613, %v635, %v637
      %v639 = vrot.slane %v532, 1
      %v640 = vrot.slane %v533, 1
      %v641 = vsel %vm613, %v639, %v640
      %v642 = vrot.slane %v534, 1
      %v643 = vsel %vm613, %v640, %v642
      %v644 = vrot.slane %v535, 1
      %v645 = vrot.slane %v536, 1
      %v646 = vsel %vm613, %v644, %v645
      %v647 = vrot.slane %v537, 1
      %v648 = vsel %vm613, %v645, %v647
      %v649 = vrot.slane %v538, 1
      %v650 = vrot.slane %v539, 1
      %v651 = vsel %vm613, %v649, %v650
      %v652 = vrot.slane %v540, 1
      %v653 = vsel %vm613, %v650, %v652
      %v654 = vrot.slane %v541, 1
      %v655 = vrot.slane %v542, 1
      %v656 = vsel %vm613, %v654, %v655
      %v657 = vrot.slane %v543, 1
      %v658 = vsel %vm613, %v655, %v657
      %v659 = vrot.slane %v544, 1
      %v660 = vrot.slane %v545, 1
      %v661 = vsel %vm613, %v659, %v660
      %v662 = vrot.slane %v546, 1
      %v663 = vsel %vm613, %v660, %v662
      %v664 = vrot.slane %v547, 1
      %v665 = vrot.slane %v548, 1
      %v666 = vsel %vm613, %v664, %v665
      %v667 = vrot.slane %v549, 1
      %v668 = vsel %vm613, %v665, %v667
      %v669 = vrot.slane %v550, 1
      %v670 = vrot.slane %v551, 1
      %v671 = vsel %vm613, %v669, %v670
      %v672 = vrot.slane %v552, 1
      %v673 = vsel %vm613, %v670, %v672
      %v674 = vrot.slane %v553, 1
      %v675 = vrot.slane %v554, 1
      %v676 = vsel %vm613, %v674, %v675
      %v677 = vrot.slane %v555, 1
      %v678 = vsel %vm613, %v675, %v677
      %v679 = vrot.slane %v556, 1
      %v680 = vrot.slane %v557, 1
      %v681 = vsel %vm613, %v679, %v680
      %v682 = vrot.slane %v558, 1
      %v683 = vsel %vm613, %v680, %v682
      %v684 = vrot.slane %v559, 1
      %v685 = vrot.slane %v560, 1
      %v686 = vsel %vm613, %v684, %v685
      %v687 = vrot.slane %v561, 1
      %v688 = vsel %vm613, %v685, %v687
      %v689 = vrot.slane %v562, 1
      %v690 = vrot.slane %v563, 1
      %v691 = vsel %vm613, %v689, %v690
      %v692 = vrot.slane %v564, 1
      %v693 = vsel %vm613, %v690, %v692
      %v726 = vadd.f32 %v445, %v616
      %v727 = vadd.f32 %v446, %v618
      %v728 = vadd.f32 %v447, %v621
      %v729 = vadd.f32 %v448, %v623
      %v730 = vadd.f32 %v449, %v626
      %v731 = vadd.f32 %v450, %v628
      %v732 = vadd.f32 %v451, %v631
      %v733 = vadd.f32 %v452, %v633
      %v734 = vadd.f32 %v453, %v636
      %v735 = vadd.f32 %v454, %v638
      %v736 = vadd.f32 %v455, %v641
      %v737 = vadd.f32 %v456, %v643
      %v738 = vadd.f32 %v457, %v646
      %v739 = vadd.f32 %v458, %v648
      %v740 = vadd.f32 %v459, %v651
      %v741 = vadd.f32 %v460, %v653
      %v742 = vadd.f32 %v461, %v656
      %v743 = vadd.f32 %v462, %v658
      %v744 = vadd.f32 %v463, %v661
      %v745 = vadd.f32 %v464, %v663
      %v746 = vadd.f32 %v465, %v666
      %v747 = vadd.f32 %v466, %v668
      %v748 = vadd.f32 %v467, %v671
      %v749 = vadd.f32 %v468, %v673
      %v750 = vadd.f32 %v469, %v676
      %v751 = vadd.f32 %v470, %v678
      %v752 = vadd.f32 %v471, %v681
      %v753 = vadd.f32 %v472, %v683
      %v754 = vadd.f32 %v473, %v686
      %v755 = vadd.f32 %v474, %v688
      %v756 = vadd.f32 %v475, %v691
      %v757 = vadd.f32 %v476, %v693
      %v758 = vlaneseq
      %v759 = vshrl.u32 %v758, 7
      %v760 = vsub.s32 4, %v759
      %v761 = vrot.slane %v199, %v760
      %v762 = vmul.f32 %v239, %v761
      %v763 = vmul.f32 %v240, %v761
      %v764 = vmul.f32 %v496, %v761
      %v765 = vmul.f32 %v241, %v761
      %v766 = vmul.f32 %v242, %v761
      %v767 = vmul.f32 %v497, %v761
      %v768 = vmul.f32 %v243, %v761
      %v769 = vmul.f32 %v244, %v761
      %v770 = vmul.f32 %v498, %v761
      %v771 = vmul.f32 %v245, %v761
      %v772 = vmul.f32 %v246, %v761
      %v773 = vmul.f32 %v499, %v761
      %v774 = vmul.f32 %v247, %v761
      %v775 = vmul.f32 %v248, %v761
      %v776 = vmul.f32 %v500, %v761
      %v777 = vmul.f32 %v249, %v761
      %v778 = vmul.f32 %v250, %v761
      %v779 = vmul.f32 %v501, %v761
      %v780 = vmul.f32 %v251, %v761
      %v781 = vmul.f32 %v252, %v761
      %v782 = vmul.f32 %v502, %v761
      %v783 = vmul.f32 %v253, %v761
      %v784 = vmul.f32 %v254, %v761
      %v785 = vmul.f32 %v503, %v761
      %v786 = vmul.f32 %v255, %v761
      %v787 = vmul.f32 %v256, %v761
      %v788 = vmul.f32 %v504, %v761
      %v789 = vmul.f32 %v257, %v761
      %v790 = vmul.f32 %v258, %v761
      %v791 = vmul.f32 %v505, %v761
      %v792 = vmul.f32 %v259, %v761
      %v793 = vmul.f32 %v260, %v761
      %v794 = vmul.f32 %v506, %v761
      %v795 = vmul.f32 %v261, %v761
      %v796 = vmul.f32 %v262, %v761
      %v797 = vmul.f32 %v507, %v761
      %v798 = vmul.f32 %v263, %v761
      %v799 = vmul.f32 %v264, %v761
      %v800 = vmul.f32 %v508, %v761
      %v801 = vmul.f32 %v265, %v761
      %v802 = vmul.f32 %v266, %v761
      %v803 = vmul.f32 %v509, %v761
      %v804 = vmul.f32 %v267, %v761
      %v805 = vmul.f32 %v268, %v761
      %v806 = vmul.f32 %v510, %v761
      %v807 = vmul.f32 %v269, %v761
      %v808 = vmul.f32 %v270, %v761
      %v809 = vmul.f32 %v511, %v761
      %v858 = vrot.slane %v762, 1
      %v859 = vrot.slane %v763, 1
      %v860 = vsel %vm613, %v858, %v859
      %v861 = vrot.slane %v764, 1
      %v862 = vsel %vm613, %v859, %v861
      %v863 = vrot.slane %v765, 1
      %v864 = vrot.slane %v766, 1
      %v865 = vsel %vm613, %v863, %v864
      %v866 = vrot.slane %v767, 1
      %v867 = vsel %vm613, %v864, %v866
      %v868 = vrot.slane %v768, 1
      %v869 = vrot.slane %v769, 1
      %v870 = vsel %vm613, %v868, %v869
      %v871 = vrot.slane %v770, 1
      %v872 = vsel %vm613, %v869, %v871
      %v873 = vrot.slane %v771, 1
      %v874 = vrot.slane %v772, 1
      %v875 = vsel %vm613, %v873, %v874
      %v876 = vrot.slane %v773, 1
      %v877 = vsel %vm613, %v874, %v876
      %v878 = vrot.slane %v774, 1
      %v879 = vrot.slane %v775, 1
      %v880 = vsel %vm613, %v878, %v879
      %v881 = vrot.slane %v776, 1
      %v882 = vsel %vm613, %v879, %v881
      %v883 = vrot.slane %v777, 1
      %v884 = vrot.slane %v778, 1
      %v885 = vsel %vm613, %v883, %v884
      %v886 = vrot.slane %v779, 1
      %v887 = vsel %vm613, %v884, %v886
      %v888 = vrot.slane %v780, 1
      %v889 = vrot.slane %v781, 1
      %v890 = vsel %vm613, %v888, %v889
      %v891 = vrot.slane %v782, 1
      %v892 = vsel %vm613, %v889, %v891
      %v893 = vrot.slane %v783, 1
      %v894 = vrot.slane %v784, 1
      %v895 = vsel %vm613, %v893, %v894
      %v896 = vrot.slane %v785, 1
      %v897 = vsel %vm613, %v894, %v896
      %v898 = vrot.slane %v786, 1
      %v899 = vrot.slane %v787, 1
      %v900 = vsel %vm613, %v898, %v899
      %v901 = vrot.slane %v788, 1
      %v902 = vsel %vm613, %v899, %v901
      %v903 = vrot.slane %v789, 1
      %v904 = vrot.slane %v790, 1
      %v905 = vsel %vm613, %v903, %v904
      %v906 = vrot.slane %v791, 1
      %v907 = vsel %vm613, %v904, %v906
      %v908 = vrot.slane %v792, 1
      %v909 = vrot.slane %v793, 1
      %v910 = vsel %vm613, %v908, %v909
      %v911 = vrot.slane %v794, 1
      %v912 = vsel %vm613, %v909, %v911
      %v913 = vrot.slane %v795, 1
      %v914 = vrot.slane %v796, 1
      %v915 = vsel %vm613, %v913, %v914
      %v916 = vrot.slane %v797, 1
      %v917 = vsel %vm613, %v914, %v916
      %v918 = vrot.slane %v798, 1
      %v919 = vrot.slane %v799, 1
      %v920 = vsel %vm613, %v918, %v919
      %v921 = vrot.slane %v800, 1
      %v922 = vsel %vm613, %v919, %v921
      %v923 = vrot.slane %v801, 1
      %v924 = vrot.slane %v802, 1
      %v925 = vsel %vm613, %v923, %v924
      %v926 = vrot.slane %v803, 1
      %v927 = vsel %vm613, %v924, %v926
      %v928 = vrot.slane %v804, 1
      %v929 = vrot.slane %v805, 1
      %v930 = vsel %vm613, %v928, %v929
      %v931 = vrot.slane %v806, 1
      %v932 = vsel %vm613, %v929, %v931
      %v933 = vrot.slane %v807, 1
      %v934 = vrot.slane %v808, 1
      %v935 = vsel %vm613, %v933, %v934
      %v936 = vrot.slane %v809, 1
      %v937 = vsel %vm613, %v934, %v936
      %v970 = vadd.f32 %v726, %v860
      %v971 = vadd.f32 %v727, %v862
      %v972 = vadd.f32 %v728, %v865
      %v973 = vadd.f32 %v729, %v867
      %v974 = vadd.f32 %v730, %v870
      %v975 = vadd.f32 %v731, %v872
      %v976 = vadd.f32 %v732, %v875
      %v977 = vadd.f32 %v733, %v877
      %v978 = vadd.f32 %v734, %v880
      %v979 = vadd.f32 %v735, %v882
      %v980 = vadd.f32 %v736, %v885
      %v981 = vadd.f32 %v737, %v887
      %v982 = vadd.f32 %v738, %v890
      %v983 = vadd.f32 %v739, %v892
      %v984 = vadd.f32 %v740, %v895
      %v985 = vadd.f32 %v741, %v897
      %v986 = vadd.f32 %v742, %v900
      %v987 = vadd.f32 %v743, %v902
      %v988 = vadd.f32 %v744, %v905
      %v989 = vadd.f32 %v745, %v907
      %v990 = vadd.f32 %v746, %v910
      %v991 = vadd.f32 %v747, %v912
      %v992 = vadd.f32 %v748, %v915
      %v993 = vadd.f32 %v749, %v917
      %v994 = vadd.f32 %v750, %v920
      %v995 = vadd.f32 %v751, %v922
      %v996 = vadd.f32 %v752, %v925
      %v997 = vadd.f32 %v753, %v927
      %v998 = vadd.f32 %v754, %v930
      %v999 = vadd.f32 %v755, %v932
      %v1000 = vadd.f32 %v756, %v935
      %v1001 = vadd.f32 %v757, %v937
      %v1002 = vlaneseq
      %v1003 = vshrl.u32 %v1002, 7
      %v1004 = vsub.s32 7, %v1003
      %v1005 = vrot.slane %v199, %v1004
      %v1006 = vmul.f32 %v241, %v1005
      %v1007 = vmul.f32 %v242, %v1005
      %v1008 = vmul.f32 %v497, %v1005
      %v1009 = vmul.f32 %v243, %v1005
      %v1010 = vmul.f32 %v244, %v1005
      %v1011 = vmul.f32 %v498, %v1005
      %v1012 = vmul.f32 %v245, %v1005
      %v1013 = vmul.f32 %v246, %v1005
      %v1014 = vmul.f32 %v499, %v1005
      %v1015 = vmul.f32 %v247, %v1005
      %v1016 = vmul.f32 %v248, %v1005
      %v1017 = vmul.f32 %v500, %v1005
      %v1018 = vmul.f32 %v249, %v1005
      %v1019 = vmul.f32 %v250, %v1005
      %v1020 = vmul.f32 %v501, %v1005
      %v1021 = vmul.f32 %v251, %v1005
      %v1022 = vmul.f32 %v252, %v1005
      %v1023 = vmul.f32 %v502, %v1005
      %v1024 = vmul.f32 %v253, %v1005
      %v1025 = vmul.f32 %v254, %v1005
      %v1026 = vmul.f32 %v503, %v1005
      %v1027 = vmul.f32 %v255, %v1005
      %v1028 = vmul.f32 %v256, %v1005
      %v1029 = vmul.f32 %v504, %v1005
      %v1030 = vmul.f32 %v257, %v1005
      %v1031 = vmul.f32 %v258, %v1005
      %v1032 = vmul.f32 %v505, %v1005
      %v1033 = vmul.f32 %v259, %v1005
      %v1034 = vmul.f32 %v260, %v1005
      %v1035 = vmul.f32 %v506, %v1005
      %v1036 = vmul.f32 %v261, %v1005
      %v1037 = vmul.f32 %v262, %v1005
      %v1038 = vmul.f32 %v507, %v1005
      %v1039 = vmul.f32 %v263, %v1005
      %v1040 = vmul.f32 %v264, %v1005
      %v1041 = vmul.f32 %v508, %v1005
      %v1042 = vmul.f32 %v265, %v1005
      %v1043 = vmul.f32 %v266, %v1005
      %v1044 = vmul.f32 %v509, %v1005
      %v1045 = vmul.f32 %v267, %v1005
      %v1046 = vmul.f32 %v268, %v1005
      %v1047 = vmul.f32 %v510, %v1005
      %v1048 = vmul.f32 %v269, %v1005
      %v1049 = vmul.f32 %v270, %v1005
      %v1050 = vmul.f32 %v511, %v1005
      %v1051 = vmul.f32 %v271, %v1005
      %v1052 = vmul.f32 %v272, %v1005
      %v1053 = vmul.f32 %v512, %v1005
      %v1102 = vrot.slane %v1006, 1
      %v1103 = vrot.slane %v1007, 1
      %v1104 = vsel %vm613, %v1102, %v1103
      %v1105 = vrot.slane %v1008, 1
      %v1106 = vsel %vm613, %v1103, %v1105
      %v1107 = vrot.slane %v1009, 1
      %v1108 = vrot.slane %v1010, 1
      %v1109 = vsel %vm613, %v1107, %v1108
      %v1110 = vrot.slane %v1011, 1
      %v1111 = vsel %vm613, %v1108, %v1110
      %v1112 = vrot.slane %v1012, 1
      %v1113 = vrot.slane %v1013, 1
      %v1114 = vsel %vm613, %v1112, %v1113
      %v1115 = vrot.slane %v1014, 1
      %v1116 = vsel %vm613, %v1113, %v1115
      %v1117 = vrot.slane %v1015, 1
      %v1118 = vrot.slane %v1016, 1
      %v1119 = vsel %vm613, %v1117, %v1118
      %v1120 = vrot.slane %v1017, 1
      %v1121 = vsel %vm613, %v1118, %v1120
      %v1122 = vrot.slane %v1018, 1
      %v1123 = vrot.slane %v1019, 1
      %v1124 = vsel %vm613, %v1122, %v1123
      %v1125 = vrot.slane %v1020, 1
      %v1126 = vsel %vm613, %v1123, %v1125
      %v1127 = vrot.slane %v1021, 1
      %v1128 = vrot.slane %v1022, 1
      %v1129 = vsel %vm613, %v1127, %v1128
      %v1130 = vrot.slane %v1023, 1
      %v1131 = vsel %vm613, %v1128, %v1130
      %v1132 = vrot.slane %v1024, 1
      %v1133 = vrot.slane %v1025, 1
      %v1134 = vsel %vm613, %v1132, %v1133
      %v1135 = vrot.slane %v1026, 1
      %v1136 = vsel %vm613, %v1133, %v1135
      %v1137 = vrot.slane %v1027, 1
      %v1138 = vrot.slane %v1028, 1
      %v1139 = vsel %vm613, %v1137, %v1138
      %v1140 = vrot.slane %v1029, 1
      %v1141 = vsel %vm613, %v1138, %v1140
      %v1142 = vrot.slane %v1030, 1
      %v1143 = vrot.slane %v1031, 1
      %v1144 = vsel %vm613, %v1142, %v1143
      %v1145 = vrot.slane %v1032, 1
      %v1146 = vsel %vm613, %v1143, %v1145
      %v1147 = vrot.slane %v1033, 1
      %v1148 = vrot.slane %v1034, 1
      %v1149 = vsel %vm613, %v1147, %v1148
      %v1150 = vrot.slane %v1035, 1
      %v1151 = vsel %vm613, %v1148, %v1150
      %v1152 = vrot.slane %v1036, 1
      %v1153 = vrot.slane %v1037, 1
      %v1154 = vsel %vm613, %v1152, %v1153
      %v1155 = vrot.slane %v1038, 1
      %v1156 = vsel %vm613, %v1153, %v1155
      %v1157 = vrot.slane %v1039, 1
      %v1158 = vrot.slane %v1040, 1
      %v1159 = vsel %vm613, %v1157, %v1158
      %v1160 = vrot.slane %v1041, 1
      %v1161 = vsel %vm613, %v1158, %v1160
      %v1162 = vrot.slane %v1042, 1
      %v1163 = vrot.slane %v1043, 1
      %v1164 = vsel %vm613, %v1162, %v1163
      %v1165 = vrot.slane %v1044, 1
      %v1166 = vsel %vm613, %v1163, %v1165
      %v1167 = vrot.slane %v1045, 1
      %v1168 = vrot.slane %v1046, 1
      %v1169 = vsel %vm613, %v1167, %v1168
      %v1170 = vrot.slane %v1047, 1
      %v1171 = vsel %vm613, %v1168, %v1170
      %v1172 = vrot.slane %v1048, 1
      %v1173 = vrot.slane %v1049, 1
      %v1174 = vsel %vm613, %v1172, %v1173
      %v1175 = vrot.slane %v1050, 1
      %v1176 = vsel %vm613, %v1173, %v1175
      %v1177 = vrot.slane %v1051, 1
      %v1178 = vrot.slane %v1052, 1
      %v1179 = vsel %vm613, %v1177, %v1178
      %v1180 = vrot.slane %v1053, 1
      %v1181 = vsel %vm613, %v1178, %v1180
      %v1214 = vadd.f32 %v970, %v1104
      %v1215 = vadd.f32 %v971, %v1106
      %v1216 = vadd.f32 %v972, %v1109
      %v1217 = vadd.f32 %v973, %v1111
      %v1218 = vadd.f32 %v974, %v1114
      %v1219 = vadd.f32 %v975, %v1116
      %v1220 = vadd.f32 %v976, %v1119
      %v1221 = vadd.f32 %v977, %v1121
      %v1222 = vadd.f32 %v978, %v1124
      %v1223 = vadd.f32 %v979, %v1126
      %v1224 = vadd.f32 %v980, %v1129
      %v1225 = vadd.f32 %v981, %v1131
      %v1226 = vadd.f32 %v982, %v1134
      %v1227 = vadd.f32 %v983, %v1136
      %v1228 = vadd.f32 %v984, %v1139
      %v1229 = vadd.f32 %v985, %v1141
      %v1230 = vadd.f32 %v986, %v1144
      %v1231 = vadd.f32 %v987, %v1146
      %v1232 = vadd.f32 %v988, %v1149
      %v1233 = vadd.f32 %v989, %v1151
      %v1234 = vadd.f32 %v990, %v1154
      %v1235 = vadd.f32 %v991, %v1156
      %v1236 = vadd.f32 %v992, %v1159
      %v1237 = vadd.f32 %v993, %v1161
      %v1238 = vadd.f32 %v994, %v1164
      %v1239 = vadd.f32 %v995, %v1166
      %v1240 = vadd.f32 %v996, %v1169
      %v1241 = vadd.f32 %v997, %v1171
      %v1242 = vadd.f32 %v998, %v1174
      %v1243 = vadd.f32 %v999, %v1176
      %v1244 = vadd.f32 %v1000, %v1179
      %v1245 = vadd.f32 %v1001, %v1181
      %v1246 = vld [vmem:[%s192] sm:$0xe]
      %v1247 = vld [vmem:[%s192 + $0xc] sm:$0xe]
      %v1248 = vld [vmem:[%s192 + $0x18] sm:$0xe]
      %v1249 = vld [vmem:[%s192 + $0x24] sm:$0xe]
      %v1250 = vld [vmem:[%s192 + $0x30] sm:$0xe]
      %v1251 = vld [vmem:[%s192 + $0x3c] sm:$0xe]
      %v1252 = vld [vmem:[%s192 + $0x48] sm:$0xe]
      %v1253 = vld [vmem:[%s192 + $0x54] sm:$0xe]
      %v1254 = vld [vmem:[%s192 + $0x60] sm:$0xe]
      %v1255 = vld [vmem:[%s192 + $0x6c] sm:$0xe]
      %v1256 = vld [vmem:[%s192 + $0x78] sm:$0xe]
      %v1257 = vld [vmem:[%s192 + $0x84] sm:$0xe]
      %v1258 = vld [vmem:[%s192 + $0x90] sm:$0xe]
      %v1259 = vld [vmem:[%s192 + $0x9c] sm:$0xe]
      %v1260 = vld [vmem:[%s192 + $0xa8] sm:$0xe]
      %v1261 = vld [vmem:[%s192 + $0xb4] sm:$0xe]
      %v1262 = vld [vmem:[%s192 + $0xc0] sm:$0xe]
      %v1263 = vld [vmem:[%s192 + $0xcc] sm:$0xe]
      %v1264 = vunpack.c.l.bf16 %v1246
      %v1265 = vunpack.c.l.bf16 %v1247
      %v1266 = vunpack.c.l.bf16 %v1248
      %v1267 = vunpack.c.l.bf16 %v1249
      %v1268 = vunpack.c.l.bf16 %v1250
      %v1269 = vunpack.c.l.bf16 %v1251
      %v1270 = vunpack.c.l.bf16 %v1252
      %v1271 = vunpack.c.l.bf16 %v1253
      %v1272 = vunpack.c.l.bf16 %v1254
      %v1273 = vunpack.c.l.bf16 %v1255
      %v1274 = vunpack.c.l.bf16 %v1256
      %v1275 = vunpack.c.l.bf16 %v1257
      %v1276 = vunpack.c.l.bf16 %v1258
      %v1277 = vunpack.c.l.bf16 %v1259
      %v1278 = vunpack.c.l.bf16 %v1260
      %v1279 = vunpack.c.l.bf16 %v1261
      %v1280 = vunpack.c.l.bf16 %v1262
      %v1281 = vunpack.c.l.bf16 %v1263
      %v1282 = vlaneseq
      %v1283 = vshrl.u32 %v1282, 7
      %v1284 = vsub.s32 2, %v1283
      %v1285 = vrot.slane %v199, %v1284
      %v1286 = vmul.f32 %v1264, %v1285
      %v1287 = vmul.f32 %v238, %v1285
      %v1288 = vmul.f32 %v495, %v1285
      %v1289 = vmul.f32 %v1265, %v1285
      %v1290 = vmul.f32 %v240, %v1285
      %v1291 = vmul.f32 %v496, %v1285
      %v1292 = vmul.f32 %v1266, %v1285
      %v1293 = vmul.f32 %v242, %v1285
      %v1294 = vmul.f32 %v497, %v1285
      %v1295 = vmul.f32 %v1267, %v1285
      %v1296 = vmul.f32 %v244, %v1285
      %v1297 = vmul.f32 %v498, %v1285
      %v1298 = vmul.f32 %v1268, %v1285
      %v1299 = vmul.f32 %v246, %v1285
      %v1300 = vmul.f32 %v499, %v1285
      %v1301 = vmul.f32 %v1269, %v1285
      %v1302 = vmul.f32 %v248, %v1285
      %v1303 = vmul.f32 %v500, %v1285
      %v1304 = vmul.f32 %v1270, %v1285
      %v1305 = vmul.f32 %v250, %v1285
      %v1306 = vmul.f32 %v501, %v1285
      %v1307 = vmul.f32 %v1271, %v1285
      %v1308 = vmul.f32 %v252, %v1285
      %v1309 = vmul.f32 %v502, %v1285
      %v1310 = vmul.f32 %v1272, %v1285
      %v1311 = vmul.f32 %v254, %v1285
      %v1312 = vmul.f32 %v503, %v1285
      %v1313 = vmul.f32 %v1273, %v1285
      %v1314 = vmul.f32 %v256, %v1285
      %v1315 = vmul.f32 %v504, %v1285
      %v1316 = vmul.f32 %v1274, %v1285
      %v1317 = vmul.f32 %v258, %v1285
      %v1318 = vmul.f32 %v505, %v1285
      %v1319 = vmul.f32 %v1275, %v1285
      %v1320 = vmul.f32 %v260, %v1285
      %v1321 = vmul.f32 %v506, %v1285
      %v1322 = vmul.f32 %v1276, %v1285
      %v1323 = vmul.f32 %v262, %v1285
      %v1324 = vmul.f32 %v507, %v1285
      %v1325 = vmul.f32 %v1277, %v1285
      %v1326 = vmul.f32 %v264, %v1285
      %v1327 = vmul.f32 %v508, %v1285
      %v1328 = vmul.f32 %v1278, %v1285
      %v1329 = vmul.f32 %v266, %v1285
      %v1330 = vmul.f32 %v509, %v1285
      %v1331 = vmul.f32 %v1279, %v1285
      %v1332 = vmul.f32 %v268, %v1285
      %v1333 = vmul.f32 %v510, %v1285
      %vm1382 = vcmask 1045504
      %v1383 = vrot.slane %v1286, 2
      %v1384 = vrot.slane %v1287, 2
      %v1385 = vsel %vm1382, %v1383, %v1384
      %v1386 = vrot.slane %v1288, 2
      %v1387 = vsel %vm1382, %v1384, %v1386
      %v1388 = vrot.slane %v1289, 2
      %v1389 = vrot.slane %v1290, 2
      %v1390 = vsel %vm1382, %v1388, %v1389
      %v1391 = vrot.slane %v1291, 2
      %v1392 = vsel %vm1382, %v1389, %v1391
      %v1393 = vrot.slane %v1292, 2
      %v1394 = vrot.slane %v1293, 2
      %v1395 = vsel %vm1382, %v1393, %v1394
      %v1396 = vrot.slane %v1294, 2
      %v1397 = vsel %vm1382, %v1394, %v1396
      %v1398 = vrot.slane %v1295, 2
      %v1399 = vrot.slane %v1296, 2
      %v1400 = vsel %vm1382, %v1398, %v1399
      %v1401 = vrot.slane %v1297, 2
      %v1402 = vsel %vm1382, %v1399, %v1401
      %v1403 = vrot.slane %v1298, 2
      %v1404 = vrot.slane %v1299, 2
      %v1405 = vsel %vm1382, %v1403, %v1404
      %v1406 = vrot.slane %v1300, 2
      %v1407 = vsel %vm1382, %v1404, %v1406
      %v1408 = vrot.slane %v1301, 2
      %v1409 = vrot.slane %v1302, 2
      %v1410 = vsel %vm1382, %v1408, %v1409
      %v1411 = vrot.slane %v1303, 2
      %v1412 = vsel %vm1382, %v1409, %v1411
      %v1413 = vrot.slane %v1304, 2
      %v1414 = vrot.slane %v1305, 2
      %v1415 = vsel %vm1382, %v1413, %v1414
      %v1416 = vrot.slane %v1306, 2
      %v1417 = vsel %vm1382, %v1414, %v1416
      %v1418 = vrot.slane %v1307, 2
      %v1419 = vrot.slane %v1308, 2
      %v1420 = vsel %vm1382, %v1418, %v1419
      %v1421 = vrot.slane %v1309, 2
      %v1422 = vsel %vm1382, %v1419, %v1421
      %v1423 = vrot.slane %v1310, 2
      %v1424 = vrot.slane %v1311, 2
      %v1425 = vsel %vm1382, %v1423, %v1424
      %v1426 = vrot.slane %v1312, 2
      %v1427 = vsel %vm1382, %v1424, %v1426
      %v1428 = vrot.slane %v1313, 2
      %v1429 = vrot.slane %v1314, 2
      %v1430 = vsel %vm1382, %v1428, %v1429
      %v1431 = vrot.slane %v1315, 2
      %v1432 = vsel %vm1382, %v1429, %v1431
      %v1433 = vrot.slane %v1316, 2
      %v1434 = vrot.slane %v1317, 2
      %v1435 = vsel %vm1382, %v1433, %v1434
      %v1436 = vrot.slane %v1318, 2
      %v1437 = vsel %vm1382, %v1434, %v1436
      %v1438 = vrot.slane %v1319, 2
      %v1439 = vrot.slane %v1320, 2
      %v1440 = vsel %vm1382, %v1438, %v1439
      %v1441 = vrot.slane %v1321, 2
      %v1442 = vsel %vm1382, %v1439, %v1441
      %v1443 = vrot.slane %v1322, 2
      %v1444 = vrot.slane %v1323, 2
      %v1445 = vsel %vm1382, %v1443, %v1444
      %v1446 = vrot.slane %v1324, 2
      %v1447 = vsel %vm1382, %v1444, %v1446
      %v1448 = vrot.slane %v1325, 2
      %v1449 = vrot.slane %v1326, 2
      %v1450 = vsel %vm1382, %v1448, %v1449
      %v1451 = vrot.slane %v1327, 2
      %v1452 = vsel %vm1382, %v1449, %v1451
      %v1453 = vrot.slane %v1328, 2
      %v1454 = vrot.slane %v1329, 2
      %v1455 = vsel %vm1382, %v1453, %v1454
      %v1456 = vrot.slane %v1330, 2
      %v1457 = vsel %vm1382, %v1454, %v1456
      %v1458 = vrot.slane %v1331, 2
      %v1459 = vrot.slane %v1332, 2
      %v1460 = vsel %vm1382, %v1458, %v1459
      %v1461 = vrot.slane %v1333, 2
      %v1462 = vsel %vm1382, %v1459, %v1461
      %v1495 = vadd.f32 %v1214, %v1385
      %v1496 = vadd.f32 %v1215, %v1387
      %v1497 = vadd.f32 %v1216, %v1390
      %v1498 = vadd.f32 %v1217, %v1392
      %v1499 = vadd.f32 %v1218, %v1395
      %v1500 = vadd.f32 %v1219, %v1397
      %v1501 = vadd.f32 %v1220, %v1400
      %v1502 = vadd.f32 %v1221, %v1402
      %v1503 = vadd.f32 %v1222, %v1405
      %v1504 = vadd.f32 %v1223, %v1407
      %v1505 = vadd.f32 %v1224, %v1410
      %v1506 = vadd.f32 %v1225, %v1412
      %v1507 = vadd.f32 %v1226, %v1415
      %v1508 = vadd.f32 %v1227, %v1417
      %v1509 = vadd.f32 %v1228, %v1420
      %v1510 = vadd.f32 %v1229, %v1422
      %v1511 = vadd.f32 %v1230, %v1425
      %v1512 = vadd.f32 %v1231, %v1427
      %v1513 = vadd.f32 %v1232, %v1430
      %v1514 = vadd.f32 %v1233, %v1432
      %v1515 = vadd.f32 %v1234, %v1435
      %v1516 = vadd.f32 %v1235, %v1437
      %v1517 = vadd.f32 %v1236, %v1440
      %v1518 = vadd.f32 %v1237, %v1442
      %v1519 = vadd.f32 %v1238, %v1445
      %v1520 = vadd.f32 %v1239, %v1447
      %v1521 = vadd.f32 %v1240, %v1450
      %v1522 = vadd.f32 %v1241, %v1452
      %v1523 = vadd.f32 %v1242, %v1455
      %v1524 = vadd.f32 %v1243, %v1457
      %v1525 = vadd.f32 %v1244, %v1460
      %v1526 = vadd.f32 %v1245, %v1462
      %v1527 = vlaneseq
      %v1528 = vshrl.u32 %v1527, 7
      %v1529 = vsub.s32 5, %v1528
      %v1530 = vrot.slane %v199, %v1529
      %v1531 = vmul.f32 %v1265, %v1530
      %v1532 = vmul.f32 %v240, %v1530
      %v1533 = vmul.f32 %v496, %v1530
      %v1534 = vmul.f32 %v1266, %v1530
      %v1535 = vmul.f32 %v242, %v1530
      %v1536 = vmul.f32 %v497, %v1530
      %v1537 = vmul.f32 %v1267, %v1530
      %v1538 = vmul.f32 %v244, %v1530
      %v1539 = vmul.f32 %v498, %v1530
      %v1540 = vmul.f32 %v1268, %v1530
      %v1541 = vmul.f32 %v246, %v1530
      %v1542 = vmul.f32 %v499, %v1530
      %v1543 = vmul.f32 %v1269, %v1530
      %v1544 = vmul.f32 %v248, %v1530
      %v1545 = vmul.f32 %v500, %v1530
      %v1546 = vmul.f32 %v1270, %v1530
      %v1547 = vmul.f32 %v250, %v1530
      %v1548 = vmul.f32 %v501, %v1530
      %v1549 = vmul.f32 %v1271, %v1530
      %v1550 = vmul.f32 %v252, %v1530
      %v1551 = vmul.f32 %v502, %v1530
      %v1552 = vmul.f32 %v1272, %v1530
      %v1553 = vmul.f32 %v254, %v1530
      %v1554 = vmul.f32 %v503, %v1530
      %v1555 = vmul.f32 %v1273, %v1530
      %v1556 = vmul.f32 %v256, %v1530
      %v1557 = vmul.f32 %v504, %v1530
      %v1558 = vmul.f32 %v1274, %v1530
      %v1559 = vmul.f32 %v258, %v1530
      %v1560 = vmul.f32 %v505, %v1530
      %v1561 = vmul.f32 %v1275, %v1530
      %v1562 = vmul.f32 %v260, %v1530
      %v1563 = vmul.f32 %v506, %v1530
      %v1564 = vmul.f32 %v1276, %v1530
      %v1565 = vmul.f32 %v262, %v1530
      %v1566 = vmul.f32 %v507, %v1530
      %v1567 = vmul.f32 %v1277, %v1530
      %v1568 = vmul.f32 %v264, %v1530
      %v1569 = vmul.f32 %v508, %v1530
      %v1570 = vmul.f32 %v1278, %v1530
      %v1571 = vmul.f32 %v266, %v1530
      %v1572 = vmul.f32 %v509, %v1530
      %v1573 = vmul.f32 %v1279, %v1530
      %v1574 = vmul.f32 %v268, %v1530
      %v1575 = vmul.f32 %v510, %v1530
      %v1576 = vmul.f32 %v1280, %v1530
      %v1577 = vmul.f32 %v270, %v1530
      %v1578 = vmul.f32 %v511, %v1530
      %v1627 = vrot.slane %v1531, 2
      %v1628 = vrot.slane %v1532, 2
      %v1629 = vsel %vm1382, %v1627, %v1628
      %v1630 = vrot.slane %v1533, 2
      %v1631 = vsel %vm1382, %v1628, %v1630
      %v1632 = vrot.slane %v1534, 2
      %v1633 = vrot.slane %v1535, 2
      %v1634 = vsel %vm1382, %v1632, %v1633
      %v1635 = vrot.slane %v1536, 2
      %v1636 = vsel %vm1382, %v1633, %v1635
      %v1637 = vrot.slane %v1537, 2
      %v1638 = vrot.slane %v1538, 2
      %v1639 = vsel %vm1382, %v1637, %v1638
      %v1640 = vrot.slane %v1539, 2
      %v1641 = vsel %vm1382, %v1638, %v1640
      %v1642 = vrot.slane %v1540, 2
      %v1643 = vrot.slane %v1541, 2
      %v1644 = vsel %vm1382, %v1642, %v1643
      %v1645 = vrot.slane %v1542, 2
      %v1646 = vsel %vm1382, %v1643, %v1645
      %v1647 = vrot.slane %v1543, 2
      %v1648 = vrot.slane %v1544, 2
      %v1649 = vsel %vm1382, %v1647, %v1648
      %v1650 = vrot.slane %v1545, 2
      %v1651 = vsel %vm1382, %v1648, %v1650
      %v1652 = vrot.slane %v1546, 2
      %v1653 = vrot.slane %v1547, 2
      %v1654 = vsel %vm1382, %v1652, %v1653
      %v1655 = vrot.slane %v1548, 2
      %v1656 = vsel %vm1382, %v1653, %v1655
      %v1657 = vrot.slane %v1549, 2
      %v1658 = vrot.slane %v1550, 2
      %v1659 = vsel %vm1382, %v1657, %v1658
      %v1660 = vrot.slane %v1551, 2
      %v1661 = vsel %vm1382, %v1658, %v1660
      %v1662 = vrot.slane %v1552, 2
      %v1663 = vrot.slane %v1553, 2
      %v1664 = vsel %vm1382, %v1662, %v1663
      %v1665 = vrot.slane %v1554, 2
      %v1666 = vsel %vm1382, %v1663, %v1665
      %v1667 = vrot.slane %v1555, 2
      %v1668 = vrot.slane %v1556, 2
      %v1669 = vsel %vm1382, %v1667, %v1668
      %v1670 = vrot.slane %v1557, 2
      %v1671 = vsel %vm1382, %v1668, %v1670
      %v1672 = vrot.slane %v1558, 2
      %v1673 = vrot.slane %v1559, 2
      %v1674 = vsel %vm1382, %v1672, %v1673
      %v1675 = vrot.slane %v1560, 2
      %v1676 = vsel %vm1382, %v1673, %v1675
      %v1677 = vrot.slane %v1561, 2
      %v1678 = vrot.slane %v1562, 2
      %v1679 = vsel %vm1382, %v1677, %v1678
      %v1680 = vrot.slane %v1563, 2
      %v1681 = vsel %vm1382, %v1678, %v1680
      %v1682 = vrot.slane %v1564, 2
      %v1683 = vrot.slane %v1565, 2
      %v1684 = vsel %vm1382, %v1682, %v1683
      %v1685 = vrot.slane %v1566, 2
      %v1686 = vsel %vm1382, %v1683, %v1685
      %v1687 = vrot.slane %v1567, 2
      %v1688 = vrot.slane %v1568, 2
      %v1689 = vsel %vm1382, %v1687, %v1688
      %v1690 = vrot.slane %v1569, 2
      %v1691 = vsel %vm1382, %v1688, %v1690
      %v1692 = vrot.slane %v1570, 2
      %v1693 = vrot.slane %v1571, 2
      %v1694 = vsel %vm1382, %v1692, %v1693
      %v1695 = vrot.slane %v1572, 2
      %v1696 = vsel %vm1382, %v1693, %v1695
      %v1697 = vrot.slane %v1573, 2
      %v1698 = vrot.slane %v1574, 2
      %v1699 = vsel %vm1382, %v1697, %v1698
      %v1700 = vrot.slane %v1575, 2
      %v1701 = vsel %vm1382, %v1698, %v1700
      %v1702 = vrot.slane %v1576, 2
      %v1703 = vrot.slane %v1577, 2
      %v1704 = vsel %vm1382, %v1702, %v1703
      %v1705 = vrot.slane %v1578, 2
      %v1706 = vsel %vm1382, %v1703, %v1705
      %v1739 = vadd.f32 %v1495, %v1629
      %v1740 = vadd.f32 %v1496, %v1631
      %v1741 = vadd.f32 %v1497, %v1634
      %v1742 = vadd.f32 %v1498, %v1636
      %v1743 = vadd.f32 %v1499, %v1639
      %v1744 = vadd.f32 %v1500, %v1641
      %v1745 = vadd.f32 %v1501, %v1644
      %v1746 = vadd.f32 %v1502, %v1646
      %v1747 = vadd.f32 %v1503, %v1649
      %v1748 = vadd.f32 %v1504, %v1651
      %v1749 = vadd.f32 %v1505, %v1654
      %v1750 = vadd.f32 %v1506, %v1656
      %v1751 = vadd.f32 %v1507, %v1659
      %v1752 = vadd.f32 %v1508, %v1661
      %v1753 = vadd.f32 %v1509, %v1664
      %v1754 = vadd.f32 %v1510, %v1666
      %v1755 = vadd.f32 %v1511, %v1669
      %v1756 = vadd.f32 %v1512, %v1671
      %v1757 = vadd.f32 %v1513, %v1674
      %v1758 = vadd.f32 %v1514, %v1676
      %v1759 = vadd.f32 %v1515, %v1679
      %v1760 = vadd.f32 %v1516, %v1681
      %v1761 = vadd.f32 %v1517, %v1684
      %v1762 = vadd.f32 %v1518, %v1686
      %v1763 = vadd.f32 %v1519, %v1689
      %v1764 = vadd.f32 %v1520, %v1691
      %v1765 = vadd.f32 %v1521, %v1694
      %v1766 = vadd.f32 %v1522, %v1696
      %v1767 = vadd.f32 %v1523, %v1699
      %v1768 = vadd.f32 %v1524, %v1701
      %v1769 = vadd.f32 %v1525, %v1704
      %v1770 = vadd.f32 %v1526, %v1706
      %v1771 = vlaneseq
      %v1772 = vshrl.u32 %v1771, 7
      %v1773 = vsub.s32 0, %v1772
      %v1774 = vrot.slane %v200, %v1773
      %v1775 = vmul.f32 %v1266, %v1774
      %v1776 = vmul.f32 %v242, %v1774
      %v1777 = vmul.f32 %v497, %v1774
      %v1778 = vmul.f32 %v1267, %v1774
      %v1779 = vmul.f32 %v244, %v1774
      %v1780 = vmul.f32 %v498, %v1774
      %v1781 = vmul.f32 %v1268, %v1774
      %v1782 = vmul.f32 %v246, %v1774
      %v1783 = vmul.f32 %v499, %v1774
      %v1784 = vmul.f32 %v1269, %v1774
      %v1785 = vmul.f32 %v248, %v1774
      %v1786 = vmul.f32 %v500, %v1774
      %v1787 = vmul.f32 %v1270, %v1774
      %v1788 = vmul.f32 %v250, %v1774
      %v1789 = vmul.f32 %v501, %v1774
      %v1790 = vmul.f32 %v1271, %v1774
      %v1791 = vmul.f32 %v252, %v1774
      %v1792 = vmul.f32 %v502, %v1774
      %v1793 = vmul.f32 %v1272, %v1774
      %v1794 = vmul.f32 %v254, %v1774
      %v1795 = vmul.f32 %v503, %v1774
      %v1796 = vmul.f32 %v1273, %v1774
      %v1797 = vmul.f32 %v256, %v1774
      %v1798 = vmul.f32 %v504, %v1774
      %v1799 = vmul.f32 %v1274, %v1774
      %v1800 = vmul.f32 %v258, %v1774
      %v1801 = vmul.f32 %v505, %v1774
      %v1802 = vmul.f32 %v1275, %v1774
      %v1803 = vmul.f32 %v260, %v1774
      %v1804 = vmul.f32 %v506, %v1774
      %v1805 = vmul.f32 %v1276, %v1774
      %v1806 = vmul.f32 %v262, %v1774
      %v1807 = vmul.f32 %v507, %v1774
      %v1808 = vmul.f32 %v1277, %v1774
      %v1809 = vmul.f32 %v264, %v1774
      %v1810 = vmul.f32 %v508, %v1774
      %v1811 = vmul.f32 %v1278, %v1774
      %v1812 = vmul.f32 %v266, %v1774
      %v1813 = vmul.f32 %v509, %v1774
      %v1814 = vmul.f32 %v1279, %v1774
      %v1815 = vmul.f32 %v268, %v1774
      %v1816 = vmul.f32 %v510, %v1774
      %v1817 = vmul.f32 %v1280, %v1774
      %v1818 = vmul.f32 %v270, %v1774
      %v1819 = vmul.f32 %v511, %v1774
      %v1820 = vmul.f32 %v1281, %v1774
      %v1821 = vmul.f32 %v272, %v1774
      %v1822 = vmul.f32 %v512, %v1774
      %v1871 = vrot.slane %v1775, 2
      %v1872 = vrot.slane %v1776, 2
      %v1873 = vsel %vm1382, %v1871, %v1872
      %v1874 = vrot.slane %v1777, 2
      %v1875 = vsel %vm1382, %v1872, %v1874
      %v1876 = vrot.slane %v1778, 2
      %v1877 = vrot.slane %v1779, 2
      %v1878 = vsel %vm1382, %v1876, %v1877
      %v1879 = vrot.slane %v1780, 2
      %v1880 = vsel %vm1382, %v1877, %v1879
      %v1881 = vrot.slane %v1781, 2
      %v1882 = vrot.slane %v1782, 2
      %v1883 = vsel %vm1382, %v1881, %v1882
      %v1884 = vrot.slane %v1783, 2
      %v1885 = vsel %vm1382, %v1882, %v1884
      %v1886 = vrot.slane %v1784, 2
      %v1887 = vrot.slane %v1785, 2
      %v1888 = vsel %vm1382, %v1886, %v1887
      %v1889 = vrot.slane %v1786, 2
      %v1890 = vsel %vm1382, %v1887, %v1889
      %v1891 = vrot.slane %v1787, 2
      %v1892 = vrot.slane %v1788, 2
      %v1893 = vsel %vm1382, %v1891, %v1892
      %v1894 = vrot.slane %v1789, 2
      %v1895 = vsel %vm1382, %v1892, %v1894
      %v1896 = vrot.slane %v1790, 2
      %v1897 = vrot.slane %v1791, 2
      %v1898 = vsel %vm1382, %v1896, %v1897
      %v1899 = vrot.slane %v1792, 2
      %v1900 = vsel %vm1382, %v1897, %v1899
      %v1901 = vrot.slane %v1793, 2
      %v1902 = vrot.slane %v1794, 2
      %v1903 = vsel %vm1382, %v1901, %v1902
      %v1904 = vrot.slane %v1795, 2
      %v1905 = vsel %vm1382, %v1902, %v1904
      %v1906 = vrot.slane %v1796, 2
      %v1907 = vrot.slane %v1797, 2
      %v1908 = vsel %vm1382, %v1906, %v1907
      %v1909 = vrot.slane %v1798, 2
      %v1910 = vsel %vm1382, %v1907, %v1909
      %v1911 = vrot.slane %v1799, 2
      %v1912 = vrot.slane %v1800, 2
      %v1913 = vsel %vm1382, %v1911, %v1912
      %v1914 = vrot.slane %v1801, 2
      %v1915 = vsel %vm1382, %v1912, %v1914
      %v1916 = vrot.slane %v1802, 2
      %v1917 = vrot.slane %v1803, 2
      %v1918 = vsel %vm1382, %v1916, %v1917
      %v1919 = vrot.slane %v1804, 2
      %v1920 = vsel %vm1382, %v1917, %v1919
      %v1921 = vrot.slane %v1805, 2
      %v1922 = vrot.slane %v1806, 2
      %v1923 = vsel %vm1382, %v1921, %v1922
      %v1924 = vrot.slane %v1807, 2
      %v1925 = vsel %vm1382, %v1922, %v1924
      %v1926 = vrot.slane %v1808, 2
      %v1927 = vrot.slane %v1809, 2
      %v1928 = vsel %vm1382, %v1926, %v1927
      %v1929 = vrot.slane %v1810, 2
      %v1930 = vsel %vm1382, %v1927, %v1929
      %v1931 = vrot.slane %v1811, 2
      %v1932 = vrot.slane %v1812, 2
      %v1933 = vsel %vm1382, %v1931, %v1932
      %v1934 = vrot.slane %v1813, 2
      %v1935 = vsel %vm1382, %v1932, %v1934
      %v1936 = vrot.slane %v1814, 2
      %v1937 = vrot.slane %v1815, 2
      %v1938 = vsel %vm1382, %v1936, %v1937
      %v1939 = vrot.slane %v1816, 2
      %v1940 = vsel %vm1382, %v1937, %v1939
      %v1941 = vrot.slane %v1817, 2
      %v1942 = vrot.slane %v1818, 2
      %v1943 = vsel %vm1382, %v1941, %v1942
      %v1944 = vrot.slane %v1819, 2
      %v1945 = vsel %vm1382, %v1942, %v1944
      %v1946 = vrot.slane %v1820, 2
      %v1947 = vrot.slane %v1821, 2
      %v1948 = vsel %vm1382, %v1946, %v1947
      %v1949 = vrot.slane %v1822, 2
      %v1950 = vsel %vm1382, %v1947, %v1949
      %v1983 = vadd.f32 %v1739, %v1873
      %v1984 = vadd.f32 %v1740, %v1875
      %v1985 = vadd.f32 %v1741, %v1878
      %v1986 = vadd.f32 %v1742, %v1880
      %v1987 = vadd.f32 %v1743, %v1883
      %v1988 = vadd.f32 %v1744, %v1885
      %v1989 = vadd.f32 %v1745, %v1888
      %v1990 = vadd.f32 %v1746, %v1890
      %v1991 = vadd.f32 %v1747, %v1893
      %v1992 = vadd.f32 %v1748, %v1895
      %v1993 = vadd.f32 %v1749, %v1898
      %v1994 = vadd.f32 %v1750, %v1900
      %v1995 = vadd.f32 %v1751, %v1903
      %v1996 = vadd.f32 %v1752, %v1905
      %v1997 = vadd.f32 %v1753, %v1908
      %v1998 = vadd.f32 %v1754, %v1910
      %v1999 = vadd.f32 %v1755, %v1913
      %v2000 = vadd.f32 %v1756, %v1915
      %v2001 = vadd.f32 %v1757, %v1918
      %v2002 = vadd.f32 %v1758, %v1920
      %v2003 = vadd.f32 %v1759, %v1923
      %v2004 = vadd.f32 %v1760, %v1925
      %v2005 = vadd.f32 %v1761, %v1928
      %v2006 = vadd.f32 %v1762, %v1930
      %v2007 = vadd.f32 %v1763, %v1933
      %v2008 = vadd.f32 %v1764, %v1935
      %v2009 = vadd.f32 %v1765, %v1938
      %v2010 = vadd.f32 %v1766, %v1940
      %v2011 = vadd.f32 %v1767, %v1943
      %v2012 = vadd.f32 %v1768, %v1945
      %v2013 = vadd.f32 %v1769, %v1948
      %v2014 = vadd.f32 %v1770, %v1950
      %v2015 = vpack.c.bf16 %v1984, %v1983
      %v2016 = vpack.c.bf16 %v1986, %v1985
      %v2017 = vpack.c.bf16 %v1988, %v1987
      %v2018 = vpack.c.bf16 %v1990, %v1989
      %v2019 = vpack.c.bf16 %v1992, %v1991
      %v2020 = vpack.c.bf16 %v1994, %v1993
      %v2021 = vpack.c.bf16 %v1996, %v1995
      %v2022 = vpack.c.bf16 %v1998, %v1997
      %v2023 = vpack.c.bf16 %v2000, %v1999
      %v2024 = vpack.c.bf16 %v2002, %v2001
      %v2025 = vpack.c.bf16 %v2004, %v2003
      %v2026 = vpack.c.bf16 %v2006, %v2005
      %v2027 = vpack.c.bf16 %v2008, %v2007
      %v2028 = vpack.c.bf16 %v2010, %v2009
      %v2029 = vpack.c.bf16 %v2012, %v2011
      %v2030 = vpack.c.bf16 %v2014, %v2013
      %v2031 = vld [vmem:[%s2] sm:$0xf]
      %v2032 = vld [vmem:[%s2 + $0x4] sm:$0xf]
      %v2033 = vld [vmem:[%s2 + $0x8] sm:$0xf]
      %v2034 = vld [vmem:[%s2 + $0xc] sm:$0xf]
      %v2035 = vld [vmem:[%s2 + $0x10] sm:$0xf]
      %v2036 = vld [vmem:[%s2 + $0x14] sm:$0xf]
      %v2037 = vld [vmem:[%s2 + $0x18] sm:$0xf]
      %v2038 = vld [vmem:[%s2 + $0x1c] sm:$0xf]
      %v2039 = vld [vmem:[%s2 + $0x20] sm:$0xf]
      %v2040 = vld [vmem:[%s2 + $0x24] sm:$0xf]
      %v2041 = vld [vmem:[%s2 + $0x28] sm:$0xf]
      %v2042 = vld [vmem:[%s3] sm:$0xff]
      %v2043 = vld [vmem:[%s3 + $0x8] sm:$0xff]
      %v2044 = vld [vmem:[%s3 + $0x10] sm:$0xff]
      %v2045 = vld [vmem:[%s3 + $0x18] sm:$0xff]
      %v2046 = vld [vmem:[%s3 + $0x20] sm:$0xff]
      %v2047 = vld [vmem:[%s3 + $0x28] sm:$0xff]
      %v2048 = vld [vmem:[%s3 + $0x30] sm:$0xff]
      %v2049 = vld [vmem:[%s3 + $0x38] sm:$0xff]
      %v2050 = vld [vmem:[%s3 + $0x40] sm:$0xff]
      %v2051 = vld [vmem:[%s3 + $0x48] sm:$0xff]
      %v2052 = vld [vmem:[%s3 + $0x50] sm:$0xff]
      %2054 = vset.pattern.permute.xlu0 0
      %2055 = vperm.xlu0 %2054, %v2042
      %v2056 = vpop.permute.xlu0 %2055
      %2059 = vset.pattern.permute.xlu0 0
      %2060 = vperm.xlu0 %2059, %v2043
      %v2061 = vpop.permute.xlu0 %2060
      %2064 = vset.pattern.permute.xlu0 0
      %2065 = vperm.xlu0 %2064, %v2044
      %v2066 = vpop.permute.xlu0 %2065
      %2069 = vset.pattern.permute.xlu0 0
      %2070 = vperm.xlu0 %2069, %v2045
      %v2071 = vpop.permute.xlu0 %2070
      %2074 = vset.pattern.permute.xlu0 0
      %2075 = vperm.xlu0 %2074, %v2046
      %v2076 = vpop.permute.xlu0 %2075
      %2079 = vset.pattern.permute.xlu0 0
      %2080 = vperm.xlu0 %2079, %v2047
      %v2081 = vpop.permute.xlu0 %2080
      %2084 = vset.pattern.permute.xlu0 0
      %2085 = vperm.xlu0 %2084, %v2048
      %v2086 = vpop.permute.xlu0 %2085
      %2089 = vset.pattern.permute.xlu0 0
      %2090 = vperm.xlu0 %2089, %v2049
      %v2091 = vpop.permute.xlu0 %2090
      %2094 = vset.pattern.permute.xlu0 0
      %2095 = vperm.xlu0 %2094, %v2050
      %v2096 = vpop.permute.xlu0 %2095
      %2099 = vset.pattern.permute.xlu0 0
      %2100 = vperm.xlu0 %2099, %v2051
      %v2101 = vpop.permute.xlu0 %2100
      %2104 = vset.pattern.permute.xlu0 0
      %2105 = vperm.xlu0 %2104, %v2052
      %v2106 = vpop.permute.xlu0 %2105
      %v2119 = vunpack.c.l.b16 %v2031
      %v2120 = vunpack.c.l.b16 %v2032
      %v2121 = vunpack.c.l.b16 %v2033
      %v2122 = vunpack.c.l.b16 %v2034
      %v2123 = vunpack.c.l.b16 %v2035
      %v2124 = vunpack.c.l.b16 %v2036
      %v2125 = vunpack.c.l.b16 %v2037
      %v2126 = vunpack.c.l.b16 %v2038
      %v2127 = vunpack.c.l.b16 %v2039
      %v2128 = vunpack.c.l.b16 %v2040
      %v2129 = vunpack.c.l.b16 %v2041
      %v2130 = vpack.c.b16 %v2120, %v2119
      %v2131 = vpack.c.b16 %v2122, %v2121
      %v2132 = vpack.c.b16 %v2124, %v2123
      %v2133 = vpack.c.b16 %v2126, %v2125
      %v2134 = vpack.c.b16 %v2128, %v2127
      %v2135 = vpack.c.b16 %v2129, %v2129
      %vm2136 = vcmask 523264
      %v2138 = vsel %vm2136, %v2130, 0
      %v2141 = vsel %vm2136, %v2131, 0
      %v2144 = vsel %vm2136, %v2132, 0
      %v2147 = vsel %vm2136, %v2133, 0
      %v2150 = vsel %vm2136, %v2134, 0
      %v2153 = vsel %vm2136, %v2135, 0
      %v2156 = vsel %vm2136, %v2015, 0
      %v2159 = vsel %vm2136, %v2016, 0
      %v2162 = vsel %vm2136, %v2017, 0
      %v2165 = vsel %vm2136, %v2018, 0
      %v2168 = vsel %vm2136, %v2019, 0
      %v2171 = vsel %vm2136, %v2020, 0
      %v2174 = vsel %vm2136, %v2021, 0
      %v2177 = vsel %vm2136, %v2022, 0
      %v2180 = vsel %vm2136, %v2023, 0
      %v2183 = vsel %vm2136, %v2024, 0
      %v2186 = vsel %vm2136, %v2025, 0
      %v2189 = vsel %vm2136, %v2026, 0
      %v2192 = vsel %vm2136, %v2027, 0
      %v2195 = vsel %vm2136, %v2028, 0
      %v2198 = vsel %vm2136, %v2029, 0
      %v2201 = vsel %vm2136, %v2030, 0
      %2203 = vmatprep.subr.bf16.mxu0 0
      %2204 = vmatpush1.bf16.xpose.msra.mxu0 %v2177
      %2205 = vmatprep.subr.bf16.mxu0 0
      %2206 = vmatpush1.bf16.xpose.msra.mxu0 %v2174
      %2207 = vmatprep.subr.bf16.mxu0 0
      %2208 = vmatpush1.bf16.xpose.msra.mxu0 %v2171
      %2209 = vmatprep.subr.bf16.mxu0 0
      %2210 = vmatpush1.bf16.xpose.msra.mxu0 %v2168
      %2211 = vmatprep.subr.bf16.mxu0 0
      %2212 = vmatpush1.bf16.xpose.msra.mxu0 %v2165
      %2213 = vmatprep.subr.bf16.mxu0 0
      %2214 = vmatpush1.bf16.xpose.msra.mxu0 %v2162
      %2215 = vmatprep.subr.bf16.mxu0 0
      %2216 = vmatpush1.bf16.xpose.msra.mxu0 %v2159
      %2217 = vmatprep.subr.bf16.mxu0 0
      %2218 = vmatpush1.bf16.xpose.msra.mxu0 %v2156
      %2219 = vmatprep.subr.bf16.mxu0 0
      %2220 = vmatpush2.bf16.xpose.msra.mxu0 %v2201
      %2221 = vmatprep.subr.bf16.mxu0 0
      %2222 = vmatpush2.bf16.xpose.msra.mxu0 %v2198
      %2223 = vmatprep.subr.bf16.mxu0 0
      %2224 = vmatpush2.bf16.xpose.msra.mxu0 %v2195
      %2225 = vmatprep.subr.bf16.mxu0 0
      %2226 = vmatpush2.bf16.xpose.msra.mxu0 %v2192
      %2227 = vmatprep.subr.bf16.mxu0 0
      %2228 = vmatpush2.bf16.xpose.msra.mxu0 %v2189
      %2229 = vmatprep.subr.bf16.mxu0 0
      %2230 = vmatpush2.bf16.xpose.msra.mxu0 %v2186
      %2231 = vmatprep.subr.bf16.mxu0 0
      %2232 = vmatpush2.bf16.xpose.msra.mxu0 %v2183
      %2233 = vmatprep.subr.bf16.mxu0 0
      %2234 = vmatpush2.bf16.xpose.msra.mxu0 %v2180
      %2235 = vmatprep.mubr.bf16.mxu0 0
      %2236 = vmatmul.mubr.bf16.gmra.mxu0 %v2138
      %v2237 = vpop.f32.mrf.mxu0
      %v2238 = vadd.f32 %v2056, %v2237
      %v2239 = vpop.f32.mrf.mxu0
      %v2240 = vadd.f32 %v2056, %v2239
      %v2241 = vpop.f32.mrf.mxu0
      %v2242 = vadd.f32 %v2061, %v2241
      %v2243 = vpop.f32.mrf.mxu0
      %v2244 = vadd.f32 %v2061, %v2243
      %2245 = vmatprep.mubr.bf16.mxu0 0
      %2246 = vmatmul.mubr.bf16.gmra.mxu0 %v2141
      %v2247 = vpop.f32.mrf.mxu0
      %v2248 = vadd.f32 %v2066, %v2247
      %v2249 = vpop.f32.mrf.mxu0
      %v2250 = vadd.f32 %v2066, %v2249
      %v2251 = vpop.f32.mrf.mxu0
      %v2252 = vadd.f32 %v2071, %v2251
      %v2253 = vpop.f32.mrf.mxu0
      %v2254 = vadd.f32 %v2071, %v2253
      %2255 = vmatprep.mubr.bf16.mxu0 0
      %2256 = vmatmul.mubr.bf16.gmra.mxu0 %v2144
      %v2257 = vpop.f32.mrf.mxu0
      %v2258 = vadd.f32 %v2076, %v2257
      %v2259 = vpop.f32.mrf.mxu0
      %v2260 = vadd.f32 %v2076, %v2259
      %v2261 = vpop.f32.mrf.mxu0
      %v2262 = vadd.f32 %v2081, %v2261
      %v2263 = vpop.f32.mrf.mxu0
      %v2264 = vadd.f32 %v2081, %v2263
      %2265 = vmatprep.mubr.bf16.mxu0 0
      %2266 = vmatmul.mubr.bf16.gmra.mxu0 %v2147
      %v2267 = vpop.f32.mrf.mxu0
      %v2268 = vadd.f32 %v2086, %v2267
      %v2269 = vpop.f32.mrf.mxu0
      %v2270 = vadd.f32 %v2086, %v2269
      %v2271 = vpop.f32.mrf.mxu0
      %v2272 = vadd.f32 %v2091, %v2271
      %v2273 = vpop.f32.mrf.mxu0
      %v2274 = vadd.f32 %v2091, %v2273
      %2275 = vmatprep.mubr.bf16.mxu0 0
      %2276 = vmatmul.mubr.bf16.gmra.mxu0 %v2150
      %v2277 = vpop.f32.mrf.mxu0
      %v2278 = vadd.f32 %v2096, %v2277
      %v2279 = vpop.f32.mrf.mxu0
      %v2280 = vadd.f32 %v2096, %v2279
      %v2281 = vpop.f32.mrf.mxu0
      %v2282 = vadd.f32 %v2101, %v2281
      %v2283 = vpop.f32.mrf.mxu0
      %v2284 = vadd.f32 %v2101, %v2283
      %2285 = vmatprep.mubr.bf16.mxu0 0
      %2286 = vmatmul.mubr.bf16.gmra.mxu0 %v2153
      %v2287 = vpop.f32.mrf.mxu0
      %v2288 = vadd.f32 %v2106, %v2287
      %v2289 = vpop.f32.mrf.mxu0
      %v2290 = vadd.f32 %v2106, %v2289
      %v2291 = vpop.f32.mrf.mxu0
      %v2292 = vpop.f32.mrf.mxu0
      %2293 = vdwg.mxu0
      %v2294 = vpack.c.bf16 %v2242, %v2238
      %v2295 = vpack.c.bf16 %v2244, %v2240
      %v2296 = vpack.c.bf16 %v2252, %v2248
      %v2297 = vpack.c.bf16 %v2254, %v2250
      %v2298 = vpack.c.bf16 %v2262, %v2258
      %v2299 = vpack.c.bf16 %v2264, %v2260
      %v2300 = vpack.c.bf16 %v2272, %v2268
      %v2301 = vpack.c.bf16 %v2274, %v2270
      %v2302 = vpack.c.bf16 %v2282, %v2278
      %v2303 = vpack.c.bf16 %v2284, %v2280
      %v2304 = vpack.c.bf16 %v2288, %v2288
      %v2305 = vpack.c.bf16 %v2290, %v2290
      %v2318 = vunpack.c.l.b16 %v2294
      %v2319 = vunpack.c.l.b16 %v2295
      %v2320 = vunpack.c.h.b16 %v2294
      %v2321 = vunpack.c.h.b16 %v2295
      %v2322 = vunpack.c.l.b16 %v2296
      %v2323 = vunpack.c.l.b16 %v2297
      %v2324 = vunpack.c.h.b16 %v2296
      %v2325 = vunpack.c.h.b16 %v2297
      %v2326 = vunpack.c.l.b16 %v2298
      %v2327 = vunpack.c.l.b16 %v2299
      %v2328 = vunpack.c.h.b16 %v2298
      %v2329 = vunpack.c.h.b16 %v2299
      %v2330 = vunpack.c.l.b16 %v2300
      %v2331 = vunpack.c.l.b16 %v2301
      %v2332 = vunpack.c.h.b16 %v2300
      %v2333 = vunpack.c.h.b16 %v2301
      %v2334 = vunpack.c.l.b16 %v2302
      %v2335 = vunpack.c.l.b16 %v2303
      %v2336 = vunpack.c.h.b16 %v2302
      %v2337 = vunpack.c.h.b16 %v2303
      %v2338 = vunpack.c.l.b16 %v2304
      %v2339 = vunpack.c.l.b16 %v2305
      %v2340 = vpack.c.b16 %v2319, %v2318
      %v2341 = vpack.c.b16 %v2321, %v2320
      %v2342 = vpack.c.b16 %v2323, %v2322
      %v2343 = vpack.c.b16 %v2325, %v2324
      %v2344 = vpack.c.b16 %v2327, %v2326
      %v2345 = vpack.c.b16 %v2329, %v2328
      %v2346 = vpack.c.b16 %v2331, %v2330
      %v2347 = vpack.c.b16 %v2333, %v2332
      %v2348 = vpack.c.b16 %v2335, %v2334
      %v2349 = vpack.c.b16 %v2337, %v2336
      %v2350 = vpack.c.b16 %v2339, %v2338
      %2362 = vst [vmem:[%s197] sm:$0xff] %v2340
      %2363 = vst [vmem:[%s197 + $0x8] sm:$0xff] %v2341
      %2364 = vst [vmem:[%s197 + $0x10] sm:$0xff] %v2342
      %2365 = vst [vmem:[%s197 + $0x18] sm:$0xff] %v2343
      %2366 = vst [vmem:[%s197 + $0x20] sm:$0xff] %v2344
      %2367 = vst [vmem:[%s197 + $0x28] sm:$0xff] %v2345
      %2368 = vst [vmem:[%s197 + $0x30] sm:$0xff] %v2346
      %2369 = vst [vmem:[%s197 + $0x38] sm:$0xff] %v2347
      %2370 = vst [vmem:[%s197 + $0x40] sm:$0xff] %v2348
      %2371 = vst [vmem:[%s197 + $0x48] sm:$0xff] %v2349
      %2372 = vst [vmem:[%s197 + $0x50] sm:$0xff] %v2350
      %p2373 = scmp.lt.s32.totalorder %s15, 1
      %s2374 = scalar_select %p2373, %s15, 1
      %s2375 = smul.addr %s2374, 22
      %s2376 = smul.addr %s2375, 4
      %s2377 = scalar_lea.vmem %s4, %s2376
      // Predicated region
      $region37: #{separable_conv_block_pallas.1} parent=35 // pred_check
        %p2378 = pneg %p122
      $region38: #{separable_conv_block_pallas.1} parent=35 // pred_check_branch
        %2380 = sbr.rel (%p2378) target = $region40
      $region39: #{separable_conv_block_pallas.1} parent=35 // pred_region
        _
      $region40: #{separable_conv_block_pallas.1} parent=35 // pred_fallthru
        _
    $region36: #{separable_conv_block_pallas.1} parent=5 // pred_fallthru
      _
    %p2381 = scmp.le.s32.totalorder 2, %s10
    // Predicated region
    $region41: #{separable_conv_block_pallas.1} parent=5 // pred_check
      %p2382 = pneg %p2381
    $region42: #{separable_conv_block_pallas.1} parent=5 // pred_check_branch
      %2384 = sbr.rel (%p2382) target = $region44
    $region43: #{separable_conv_block_pallas.1} parent=5 // pred_region
      %s2385 = ssub.s32 %s10, 2
      // Predicated region
      $region45: #{separable_conv_block_pallas.1} parent=43 // pred_check
        %p2386 = pneg %p128
      $region46: #{separable_conv_block_pallas.1} parent=43 // pred_check_branch
        %2388 = sbr.rel (%p2386) target = $region48
      $region47: #{separable_conv_block_pallas.1} parent=43 // pred_region
        %p2389 = scmp.lt.s32.totalorder %s16, 1
        %s2390 = scalar_select %p2389, %s16, 1
        %s2391 = smul.addr %s2390, 22
        %s2392 = smul.addr %s2391, 4
        %s2393 = scalar_lea.vmem %s4, %s2392
      $region48: #{separable_conv_block_pallas.1} parent=43 // pred_fallthru
        _
    $region44: #{separable_conv_block_pallas.1} parent=5 // pred_fallthru
      _
  $region6: #{separable_conv_block_pallas.1} parent=0 // loop_footer
    %s14 = sadd.s32 1, %s10
  $region7: #{separable_conv_block_pallas.1} parent=0 // loop_footer_branch
    %9 = sbr.rel target = $region3
  $region8: #{separable_conv_block_pallas.1} parent=0 // loop_exit
    _

</llo_original>
